<compile_context>
chip_gen: v6e
topology: v6e:2x2x1
jax: 0.10.0
libtpu: 0.0.40
codegen_flags: <defaults>
</compile_context>

<pallas_src>
import functools

import numpy as np
import jax
import jax.numpy as jnp
from jax import lax
from jax.experimental import pallas as pl
from jax.experimental.pallas import tpu as pltpu


# ----------------------------- helpers -----------------------------------

def _spec(block_shape, index_map, *, single_buffer=False):
    """BlockSpec; operands whose block never changes get a single VMEM buffer."""
    if single_buffer:
        try:
            return pl.BlockSpec(block_shape, index_map,
                                pipeline_mode=pl.Buffered(1))
        except Exception:  # pragma: no cover - fall back if unsupported
            pass
    return pl.BlockSpec(block_shape, index_map)


# ----------------------- fused im2col matmul kernel -----------------------

def _mm_kernel(a_ref, b_ref, bias_ref, o_ref, *, relu):
    acc = jnp.dot(a_ref[...], b_ref[...], preferred_element_type=jnp.float32)
    y = acc + bias_ref[...]
    if relu:
        y = jnp.maximum(y, 0.0)
    o_ref[...] = y.astype(o_ref.dtype)


def fused_matmul(a, b, bias, *, relu, out_dtype=jnp.bfloat16):
    """relu?( a @ b + bias );  a:(M,K) bf16, b:(K,N) bf16, bias:(1,N) f32."""
    M, K = a.shape
    _, N = b.shape
    TM = min(256, M)           # v6e/v7x MXU-friendly tile (v5e could use 128)
    TN = min(256, N)           # Cout split: second parallel axis + VMEM relief
    gi = pl.cdiv(M, TM)
    gj = pl.cdiv(N, TN)
    a_spec = _spec((TM, K), lambda j, i: (i, 0), single_buffer=(gi == 1))
    b_spec = _spec((K, TN), lambda j, i: (0, j), single_buffer=(gj == 1))
    v_spec = _spec((1, TN), lambda j, i: (0, j), single_buffer=(gj == 1))
    o_spec = pl.BlockSpec((TM, TN), lambda j, i: (i, j))
    return pl.pallas_call(
        functools.partial(_mm_kernel, relu=relu),
        out_shape=jax.ShapeDtypeStruct((M, N), out_dtype),
        grid=(gj, gi),                       # B/bias only change on the outer axis
        in_specs=[a_spec, b_spec, v_spec],
        out_specs=o_spec,
        compiler_params=pltpu.CompilerParams(
            dimension_semantics=("parallel", "parallel")),
    )(a, b, bias)


# ------------------- direct 3x3 stride-1 conv (no im2col) -----------------

def _tap_body(x_ref, w_ref, b_ref, r_ref, o_ref, *, W, HW, relu):
    # Edge-column masks: tap column dj==0 must never read w==0's left neighbor,
    # dj==2 must never read w==W-1's right neighbor (W padding is emulated).
    cols = lax.broadcasted_iota(jnp.int32, (HW, 1), 0) % W
    not_left = cols != 0
    not_right = cols != (W - 1)
    tn = o_ref.shape[-1]
    acc = jnp.zeros((HW, tn), jnp.float32)
    for t in range(9):                      # unrolled: static slice offsets
        di, dj = t // 3, t % 3
        off = (di - 1) * W + (dj - 1) + (W + 1)   # in [0, 2W+2]
        lhs = x_ref[0, off:off + HW, :]
        if dj == 0:
            lhs = jnp.where(not_left, lhs, jnp.zeros_like(lhs))
        elif dj == 2:
            lhs = jnp.where(not_right, lhs, jnp.zeros_like(lhs))
        acc = acc + jnp.dot(lhs, w_ref[t], preferred_element_type=jnp.float32)
    y = acc + b_ref[...]
    if r_ref is not None:
        y = y + r_ref[0].astype(jnp.float32)
    if relu:
        y = jnp.maximum(y, 0.0)
    o_ref[0] = y.astype(o_ref.dtype)


def _conv3x3_kernel(x_ref, w_ref, b_ref, o_ref, *, W, HW, relu):
    _tap_body(x_ref, w_ref, b_ref, None, o_ref, W=W, HW=HW, relu=relu)


def _conv3x3_res_kernel(x_ref, w_ref, b_ref, r_ref, o_ref, *, W, HW, relu):
    _tap_body(x_ref, w_ref, b_ref, r_ref, o_ref, W=W, HW=HW, relu=relu)


def conv3x3_s1(x, w_tap, bias, *, relu, residual=None):
    """3x3, stride 1, pad 1 conv + bias (+residual) (+ReLU) on NHWC bf16."""
    N, H, W, C = x.shape
    Cout = w_tap.shape[-1]
    HW = H * W
    E = HW + 2 * (W + 1)
    # Flat image with (W+1) zero rows at each end == the H padding; W padding
    # is handled by masking the two edge-column taps inside the kernel.
    xe = jnp.pad(x.reshape(N, HW, C), ((0, 0), (W + 1, W + 1), (0, 0)))
    TN = min(256, Cout)
    gj = Cout // TN
    x_spec = pl.BlockSpec((1, E, C), lambda n, j: (n, 0, 0))
    w_spec = _spec((9, C, TN), lambda n, j: (0, 0, j), single_buffer=(gj == 1))
    b_spec = _spec((1, TN), lambda n, j: (0, j), single_buffer=(gj == 1))
    o_spec = pl.BlockSpec((1, HW, TN), lambda n, j: (n, 0, j))
    out_shape = jax.ShapeDtypeStruct((N, HW, Cout), jnp.bfloat16)
    cparams = pltpu.CompilerParams(dimension_semantics=("parallel", "parallel"))
    if residual is None:
        out = pl.pallas_call(
            functools.partial(_conv3x3_kernel, W=W, HW=HW, relu=relu),
            out_shape=out_shape, grid=(N, gj),
            in_specs=[x_spec, w_spec, b_spec], out_specs=o_spec,
            compiler_params=cparams,
        )(xe, w_tap, bias)
    else:
        r_spec = pl.BlockSpec((1, HW, TN), lambda n, j: (n, 0, j))
        out = pl.pallas_call(
            functools.partial(_conv3x3_res_kernel, W=W, HW=HW, relu=relu),
            out_shape=out_shape, grid=(N, gj),
            in_specs=[x_spec, w_spec, b_spec, r_spec], out_specs=o_spec,
            compiler_params=cparams,
        )(xe, w_tap, bias, residual.reshape(N, HW, Cout))
    return out.reshape(N, H, W, Cout)


# ------------------------------ pooling kernels ----------------------------

def _maxpool_kernel(*refs):
    o_ref = refs[-1]
    m = refs[0][...]
    for r in refs[1:-1]:
        m = jnp.maximum(m, r[...])
    o_ref[...] = m


def maxpool_3x3_s2_p1(x):
    """MaxPool2d(kernel=3, stride=2, padding=1) on NHWC."""
    N, H, W, C = x.shape
    xp = jnp.pad(x, ((0, 0), (1, 1), (1, 1), (0, 0)), constant_values=-jnp.inf)
    Ho = (H + 2 - 3) // 2 + 1
    Wo = (W + 2 - 3) // 2 + 1
    M = N * Ho * Wo
    views = [xp[:, i:i + 2 * Ho:2, j:j + 2 * Wo:2, :].reshape(M, C)
             for i in range(3) for j in range(3)]
    TM = min(512, M)
    spec = pl.BlockSpec((TM, C), lambda i: (i, 0))
    out = pl.pallas_call(
        _maxpool_kernel,
        out_shape=jax.ShapeDtypeStruct((M, C), x.dtype),
        grid=(pl.cdiv(M, TM),),
        in_specs=[spec] * 9,
        out_specs=spec,
        compiler_params=pltpu.CompilerParams(dimension_semantics=("parallel",)),
    )(*views)
    return out.reshape(N, Ho, Wo, C)


def _pool_kernel(p_ref, x_ref, o_ref):
    o_ref[0] = jnp.dot(p_ref[...], x_ref[0].astype(jnp.float32),
                       preferred_element_type=jnp.float32)


def adaptive_pool_matrix(in_size, out_size):
    """Exact AdaptiveAvgPool1d pooling matrix (out_size, in_size)."""
    P = np.zeros((out_size, in_size), np.float32)
    for i in range(out_size):
        s = (i * in_size) // out_size
        e = -((-(i + 1) * in_size) // out_size)       # ceil
        P[i, s:e] = 1.0 / (e - s)
    return P


def adaptive_avg_pool(x, enc_size):
    """AdaptiveAvgPool2d((enc, enc)) on NHWC -> (N, enc, enc, C) f32."""
    N, H, W, C = x.shape
    P = jnp.asarray(np.kron(adaptive_pool_matrix(H, enc_size),
                            adaptive_pool_matrix(W, enc_size)))   # (enc^2, H*W)
    Q = enc_size * enc_size
    out = pl.pallas_call(
        _pool_kernel,
        out_shape=jax.ShapeDtypeStruct((N, Q, C), jnp.float32),
        grid=(N,),
        in_specs=[pl.BlockSpec((Q, H * W), lambda n: (0, 0)),
                  pl.BlockSpec((1, H * W, C), lambda n: (n, 0, 0))],
        out_specs=pl.BlockSpec((1, Q, C), lambda n: (n, 0, 0)),
        compiler_params=pltpu.CompilerParams(dimension_semantics=("parallel",)),
    )(P, x.reshape(N, H * W, C))
    return out.reshape(N, enc_size, enc_size, C)


# ------------------------------ JAX glue ----------------------------------

def im2col(x, kh, kw, stride, pad):
    """(N,H,W,C) -> (N*Ho*Wo, kh*kw*C) patches (tap-major, channel-minor)."""
    N, H, W, C = x.shape
    if pad:
        x = jnp.pad(x, ((0, 0), (pad, pad), (pad, pad), (0, 0)))
    Hp, Wp = H + 2 * pad, W + 2 * pad
    Ho = (Hp - kh) // stride + 1
    Wo = (Wp - kw) // stride + 1
    cols = []
    for i in range(kh):
        for j in range(kw):
            cols.append(x[:, i:i + stride * Ho:stride, j:j + stride * Wo:stride, :])
    patches = jnp.concatenate(cols, axis=-1)
    return patches.reshape(N * Ho * Wo, kh * kw * C), Ho, Wo


def conv_im2col(x, w_mat, bias, kh, kw, stride, pad, *, relu):
    """Conv (stem / stride-2 / 1x1) + folded-BN bias (+ReLU) via Pallas matmul."""
    N = x.shape[0]
    patches, Ho, Wo = im2col(x, kh, kw, stride, pad)
    out = fused_matmul(patches, w_mat, bias, relu=relu)
    return out.reshape(N, Ho, Wo, w_mat.shape[1])


# --------------------------- ResNet-34 params -----------------------------

_LAYER_CFG = [(64, 3, 1), (128, 4, 2), (256, 6, 2), (512, 3, 2)]


def _conv_w(key, kh, kw, cin, cout):
    fan_in = kh * kw * cin
    return (jax.random.normal(key, (kh, kw, cin, cout), jnp.float32)
            * np.sqrt(2.0 / fan_in))


def _bn_fold(key, c):
    k1, k2, k3, k4 = jax.random.split(key, 4)
    gamma = 1.0 + 0.1 * jax.random.normal(k1, (c,), jnp.float32)
    beta = 0.1 * jax.random.normal(k2, (c,), jnp.float32)
    mean = 0.1 * jax.random.normal(k3, (c,), jnp.float32)
    var = 1.0 + 0.1 * jax.random.uniform(k4, (c,), jnp.float32)
    scale = gamma / jnp.sqrt(var + 1e-5)              # folded into the weights
    bias = (beta - mean * scale).reshape(1, c)        # stays f32 in the epilogue
    return scale, bias


def init_params(key):
    keys = iter(jax.random.split(key, 256))
    p = {}
    w = _conv_w(next(keys), 7, 7, 3, 64)
    s, p["conv1_b"] = _bn_fold(next(keys), 64)
    p["conv1_w"] = (w * s).astype(jnp.bfloat16).reshape(7 * 7 * 3, 64)
    blocks = []
    in_c = 64
    for out_c, n_blocks, stride in _LAYER_CFG:
        for bi in range(n_blocks):
            st = stride if bi == 0 else 1
            blk = {}
            w1 = _conv_w(next(keys), 3, 3, in_c, out_c)
            s1, blk["b1"] = _bn_fold(next(keys), out_c)
            w1 = (w1 * s1).astype(jnp.bfloat16)
            # stride-1 convs use the direct tap kernel (9,Cin,Cout);
            # stride-2 ones go through im2col and use the (9*Cin,Cout) matrix.
            blk["w1"] = (w1.reshape(9, in_c, out_c) if st == 1
                         else w1.reshape(9 * in_c, out_c))
            w2 = _conv_w(next(keys), 3, 3, out_c, out_c)
            s2, blk["b2"] = _bn_fold(next(keys), out_c)
            blk["w2"] = (w2 * s2).astype(jnp.bfloat16).reshape(9, out_c, out_c)
            if st != 1 or in_c != out_c:
                wd = _conv_w(next(keys), 1, 1, in_c, out_c)
                sd, blk["db"] = _bn_fold(next(keys), out_c)
                blk["dw"] = (wd * sd).astype(jnp.bfloat16).reshape(in_c, out_c)
            blocks.append(blk)
            in_c = out_c
    p["blocks"] = blocks
    return p


# ------------------------------ forward pass ------------------------------

def basic_block(x, blk):
    stride = 1 if blk["w1"].ndim == 3 else 2      # tap-format weights <=> stride 1
    if "dw" in blk:
        identity = conv_im2col(x, blk["dw"], blk["db"], 1, 1, stride, 0, relu=False)
    else:
        identity = x
    if stride == 1:
        y = conv3x3_s1(x, blk["w1"], blk["b1"], relu=True)
    else:
        y = conv_im2col(x, blk["w1"], blk["b1"], 3, 3, stride, 1, relu=True)
    # conv2 + bias + residual + ReLU fused in one direct-conv kernel
    return conv3x3_s1(y, blk["w2"], blk["b2"], relu=True, residual=identity)


@functools.partial(jax.jit, static_argnames=("enc_size",))
def encoder_forward(params, images_nchw, enc_size=14):
    # NCHW (PyTorch) -> NHWC bf16 (kernel layout)
    x = jnp.transpose(images_nchw, (0, 2, 3, 1)).astype(jnp.bfloat16)
    # stem: conv 7x7/2 + folded BN + ReLU, maxpool 3x3/2
    x = conv_im2col(x, params["conv1_w"], params["conv1_b"], 7, 7, 2, 3, relu=True)
    x = maxpool_3x3_s2_p1(x)
    # residual stages (ResNet-34: [3, 4, 6, 3] BasicBlocks)
    for blk in params["blocks"]:
        x = basic_block(x, blk)
    # AdaptiveAvgPool2d((14,14)); output layout == torch's permute(0, 2, 3, 1)
    return adaptive_avg_pool(x, enc_size)


# -------------------------------- self test --------------------------------

def _self_test():
    # direct 3x3 tap-conv (+bias+residual+ReLU) vs. lax.conv reference
    k1, k2, k3, k4, k5, k6 = jax.random.split(jax.random.PRNGKey(7), 6)
    N, H, W, C, Co = 2, 4, 4, 64, 128
    x = jax.random.normal(k1, (N, H, W, C), jnp.float32).astype(jnp.bfloat16)
    w = (0.1 * jax.random.normal(k2, (3, 3, C, Co), jnp.float32)).astype(jnp.bfloat16)
    b = 0.1 * jax.random.normal(k3, (1, Co), jnp.float32)
    r = jax.random.normal(k4, (N, H, W, Co), jnp.float32).astype(jnp.bfloat16)
    got = conv3x3_s1(x, w.reshape(9, C, Co), b, relu=True,
                     residual=r).astype(jnp.float32)
    ref = lax.conv_general_dilated(
        x.astype(jnp.float32), w.astype(jnp.float32), (1, 1), ((1, 1), (1, 1)),
        dimension_numbers=("NHWC", "HWIO", "NHWC"))
    ref = jnp.maximum(ref + b.reshape(1, 1, 1, Co) + r.astype(jnp.float32), 0.0)
    np.testing.assert_allclose(np.asarray(got), np.asarray(ref),
                               rtol=5e-2, atol=5e-2)

    # fused im2col matmul vs. plain-JAX reference
    a = jax.random.normal(k5, (64, 96), jnp.float32).astype(jnp.bfloat16)
    bm = (0.1 * jax.random.normal(k6, (96, 160), jnp.float32)).astype(jnp.bfloat16)
    bias = jnp.full((1, 160), 0.05, jnp.float32)
    got2 = fused_matmul(a, bm, bias, relu=True).astype(jnp.float32)
    ref2 = jnp.maximum(a.astype(jnp.float32) @ bm.astype(jnp.float32) + bias, 0.0)
    np.testing.assert_allclose(np.asarray(got2), np.asarray(ref2),
                               rtol=5e-2, atol=5e-2)


# --------------------------------- main ------------------------------------

if __name__ == "__main__":
    _self_test()
    key = jax.random.PRNGKey(0)
    images = jax.random.normal(key, (2, 3, 64, 64), jnp.float32)   # NCHW like PyTorch
    params = init_params(jax.random.PRNGKey(42))

    out = encoder_forward(params, images, enc_size=14)
    out = jax.block_until_ready(out)

    assert out.shape == (2, 14, 14, 512), out.shape
    assert bool(jnp.all(jnp.isfinite(out)))
    print("KERNEL_OK")
</pallas_src>

<mosaic_0001>
module attributes {stable_mosaic.version = 11 : i64} {
  func.func @_conv3x3_res_kernel(%arg0: i32, %arg1: i32, %arg2: memref<1x26x64xbf16, #tpu.memory_space<vmem>>, %arg3: memref<9x64x128xbf16, #tpu.memory_space<vmem>>, %arg4: memref<1x128xf32, #tpu.memory_space<vmem>>, %arg5: memref<1x16x128xbf16, #tpu.memory_space<vmem>>, %arg6: memref<1x16x128xbf16, #tpu.memory_space<vmem>>) attributes {dimension_semantics = [#tpu.dimension_semantics<parallel>, #tpu.dimension_semantics<parallel>], iteration_bounds = array<i64: 2, 1>, scalar_prefetch = 0 : i64, scratch_operands = 0 : i64, tpu.core_type = #tpu.core_type<tc>, window_params = [{transform_indices = @transform_0, window_bounds = array<i64: 1, 26, 64>}, {pipeline_mode = #tpu.pipeline_mode<synchronous>, transform_indices = @transform_1, window_bounds = array<i64: 9, 64, 128>}, {pipeline_mode = #tpu.pipeline_mode<synchronous>, transform_indices = @transform_2, window_bounds = array<i64: 1, 128>}, {transform_indices = @transform_3, window_bounds = array<i64: 1, 16, 128>}, {transform_indices = @transform_4, window_bounds = array<i64: 1, 16, 128>}]} {
    %0 = tpu.iota {dimensions = array<i32: 0>} : vector<16x1xi32>
    %c4_i32 = arith.constant 4 : i32
    %c0_i32 = arith.constant 0 : i32
    %1 = arith.cmpi eq, %c4_i32, %c0_i32 : i32
    %c1_i32 = arith.constant 1 : i32
    %2 = arith.select %1, %c1_i32, %c4_i32 : i32
    %3 = vector.broadcast %2 : i32 to vector<16x1xi32>
    %4 = arith.remsi %0, %3 : vector<16x1xi32>
    %c0_i32_0 = arith.constant 0 : i32
    %5 = vector.broadcast %c0_i32_0 : i32 to vector<16x1xi32>
    %6 = arith.cmpi ne, %4, %5 : vector<16x1xi32>
    %c0_i32_1 = arith.constant 0 : i32
    %7 = vector.broadcast %c0_i32_1 : i32 to vector<16x1xi32>
    %8 = arith.cmpi slt, %4, %7 : vector<16x1xi32>
    %c0_i32_2 = arith.constant 0 : i32
    %9 = arith.cmpi slt, %2, %c0_i32_2 : i32
    %10 = vector.broadcast %9 : i1 to vector<16x1xi1>
    %11 = vector.broadcast %10 : vector<16x1xi1> to vector<16x1xi1>
    %12 = arith.xori %8, %11 : vector<16x1xi1>
    %13 = arith.andi %12, %6 : vector<16x1xi1>
    %14 = vector.broadcast %2 : i32 to vector<16x1xi32>
    %15 = arith.addi %4, %14 : vector<16x1xi32>
    %16 = arith.select %13, %15, %4 : vector<16x1xi1>, vector<16x1xi32>
    %c0_i32_3 = arith.constant 0 : i32
    %17 = vector.broadcast %c0_i32_3 : i32 to vector<16x1xi32>
    %18 = arith.cmpi ne, %16, %17 : vector<16x1xi32>
    %c3_i32 = arith.constant 3 : i32
    %19 = vector.broadcast %c3_i32 : i32 to vector<16x1xi32>
    %20 = arith.cmpi ne, %16, %19 : vector<16x1xi32>
    %cst = arith.constant 0.000000e+00 : f32
    %21 = vector.broadcast %cst : f32 to vector<16x128xf32>
    %c0 = arith.constant 0 : index
    %c0_4 = arith.constant 0 : index
    %c0_5 = arith.constant 0 : index
    %22 = vector.load %arg2[%c0, %c0_4, %c0_5] : memref<1x26x64xbf16, #tpu.memory_space<vmem>>, vector<1x16x64xbf16>
    %23 = vector.shape_cast %22 : vector<1x16x64xbf16> to vector<16x64xbf16>
    %cst_6 = arith.constant 0.000000e+00 : bf16
    %24 = vector.broadcast %cst_6 : bf16 to vector<16x64xbf16>
    %25 = vector.shape_cast %18 : vector<16x1xi1> to vector<16x1xi1>
    %26 = vector.broadcast %25 : vector<16x1xi1> to vector<16x64xi1>
    %27 = arith.select %26, %23, %24 : vector<16x64xi1>, vector<16x64xbf16>
    %c0_7 = arith.constant 0 : index
    %c0_8 = arith.constant 0 : index
    %c0_9 = arith.constant 0 : index
    %28 = vector.load %arg3[%c0_7, %c0_8, %c0_9] : memref<9x64x128xbf16, #tpu.memory_space<vmem>>, vector<1x64x128xbf16>
    %29 = vector.shape_cast %28 : vector<1x64x128xbf16> to vector<64x128xbf16>
    %cst_10 = arith.constant dense<0.000000e+00> : vector<16x128xf32>
    %30 = tpu.matmul %27, %29, %cst_10 {dimension_numbers = #tpu.dot_dimension_numbers<[1], [0], [0], [1], [0, 0, 1, 1], [], []>} : vector<16x64xbf16>, vector<64x128xbf16>, vector<16x128xf32> -> vector<16x128xf32>
    %31 = arith.addf %21, %30 : vector<16x128xf32>
    %c0_11 = arith.constant 0 : index
    %c1 = arith.constant 1 : index
    %c0_12 = arith.constant 0 : index
    %32 = vector.load %arg2[%c0_11, %c1, %c0_12] : memref<1x26x64xbf16, #tpu.memory_space<vmem>>, vector<1x16x64xbf16>
    %33 = vector.shape_cast %32 : vector<1x16x64xbf16> to vector<16x64xbf16>
    %c1_13 = arith.constant 1 : index
    %c0_14 = arith.constant 0 : index
    %c0_15 = arith.constant 0 : index
    %34 = vector.load %arg3[%c1_13, %c0_14, %c0_15] : memref<9x64x128xbf16, #tpu.memory_space<vmem>>, vector<1x64x128xbf16>
    %35 = vector.shape_cast %34 : vector<1x64x128xbf16> to vector<64x128xbf16>
    %cst_16 = arith.constant dense<0.000000e+00> : vector<16x128xf32>
    %36 = tpu.matmul %33, %35, %cst_16 {dimension_numbers = #tpu.dot_dimension_numbers<[1], [0], [0], [1], [0, 0, 1, 1], [], []>} : vector<16x64xbf16>, vector<64x128xbf16>, vector<16x128xf32> -> vector<16x128xf32>
    %37 = arith.addf %31, %36 : vector<16x128xf32>
    %c0_17 = arith.constant 0 : index
    %c2 = arith.constant 2 : index
    %c0_18 = arith.constant 0 : index
    %38 = vector.load %arg2[%c0_17, %c2, %c0_18] : memref<1x26x64xbf16, #tpu.memory_space<vmem>>, vector<1x16x64xbf16>
    %39 = vector.shape_cast %38 : vector<1x16x64xbf16> to vector<16x64xbf16>
    %cst_19 = arith.constant 0.000000e+00 : bf16
    %40 = vector.broadcast %cst_19 : bf16 to vector<16x64xbf16>
    %41 = vector.shape_cast %20 : vector<16x1xi1> to vector<16x1xi1>
    %42 = vector.broadcast %41 : vector<16x1xi1> to vector<16x64xi1>
    %43 = arith.select %42, %39, %40 : vector<16x64xi1>, vector<16x64xbf16>
    %c2_20 = arith.constant 2 : index
    %c0_21 = arith.constant 0 : index
    %c0_22 = arith.constant 0 : index
    %44 = vector.load %arg3[%c2_20, %c0_21, %c0_22] : memref<9x64x128xbf16, #tpu.memory_space<vmem>>, vector<1x64x128xbf16>
    %45 = vector.shape_cast %44 : vector<1x64x128xbf16> to vector<64x128xbf16>
    %cst_23 = arith.constant dense<0.000000e+00> : vector<16x128xf32>
    %46 = tpu.matmul %43, %45, %cst_23 {dimension_numbers = #tpu.dot_dimension_numbers<[1], [0], [0], [1], [0, 0, 1, 1], [], []>} : vector<16x64xbf16>, vector<64x128xbf16>, vector<16x128xf32> -> vector<16x128xf32>
    %47 = arith.addf %37, %46 : vector<16x128xf32>
    %c0_24 = arith.constant 0 : index
    %c4 = arith.constant 4 : index
    %c0_25 = arith.constant 0 : index
    %48 = vector.load %arg2[%c0_24, %c4, %c0_25] : memref<1x26x64xbf16, #tpu.memory_space<vmem>>, vector<1x16x64xbf16>
    %49 = vector.shape_cast %48 : vector<1x16x64xbf16> to vector<16x64xbf16>
    %cst_26 = arith.constant 0.000000e+00 : bf16
    %50 = vector.broadcast %cst_26 : bf16 to vector<16x64xbf16>
    %51 = vector.shape_cast %18 : vector<16x1xi1> to vector<16x1xi1>
    %52 = vector.broadcast %51 : vector<16x1xi1> to vector<16x64xi1>
    %53 = arith.select %52, %49, %50 : vector<16x64xi1>, vector<16x64xbf16>
    %c3 = arith.constant 3 : index
    %c0_27 = arith.constant 0 : index
    %c0_28 = arith.constant 0 : index
    %54 = vector.load %arg3[%c3, %c0_27, %c0_28] : memref<9x64x128xbf16, #tpu.memory_space<vmem>>, vector<1x64x128xbf16>
    %55 = vector.shape_cast %54 : vector<1x64x128xbf16> to vector<64x128xbf16>
    %cst_29 = arith.constant dense<0.000000e+00> : vector<16x128xf32>
    %56 = tpu.matmul %53, %55, %cst_29 {dimension_numbers = #tpu.dot_dimension_numbers<[1], [0], [0], [1], [0, 0, 1, 1], [], []>} : vector<16x64xbf16>, vector<64x128xbf16>, vector<16x128xf32> -> vector<16x128xf32>
    %57 = arith.addf %47, %56 : vector<16x128xf32>
    %c0_30 = arith.constant 0 : index
    %c5 = arith.constant 5 : index
    %c0_31 = arith.constant 0 : index
    %58 = vector.load %arg2[%c0_30, %c5, %c0_31] : memref<1x26x64xbf16, #tpu.memory_space<vmem>>, vector<1x16x64xbf16>
    %59 = vector.shape_cast %58 : vector<1x16x64xbf16> to vector<16x64xbf16>
    %c4_32 = arith.constant 4 : index
    %c0_33 = arith.constant 0 : index
    %c0_34 = arith.constant 0 : index
    %60 = vector.load %arg3[%c4_32, %c0_33, %c0_34] : memref<9x64x128xbf16, #tpu.memory_space<vmem>>, vector<1x64x128xbf16>
    %61 = vector.shape_cast %60 : vector<1x64x128xbf16> to vector<64x128xbf16>
    %cst_35 = arith.constant dense<0.000000e+00> : vector<16x128xf32>
    %62 = tpu.matmul %59, %61, %cst_35 {dimension_numbers = #tpu.dot_dimension_numbers<[1], [0], [0], [1], [0, 0, 1, 1], [], []>} : vector<16x64xbf16>, vector<64x128xbf16>, vector<16x128xf32> -> vector<16x128xf32>
    %63 = arith.addf %57, %62 : vector<16x128xf32>
    %c0_36 = arith.constant 0 : index
    %c6 = arith.constant 6 : index
    %c0_37 = arith.constant 0 : index
    %64 = vector.load %arg2[%c0_36, %c6, %c0_37] : memref<1x26x64xbf16, #tpu.memory_space<vmem>>, vector<1x16x64xbf16>
    %65 = vector.shape_cast %64 : vector<1x16x64xbf16> to vector<16x64xbf16>
    %cst_38 = arith.constant 0.000000e+00 : bf16
    %66 = vector.broadcast %cst_38 : bf16 to vector<16x64xbf16>
    %67 = vector.shape_cast %20 : vector<16x1xi1> to vector<16x1xi1>
    %68 = vector.broadcast %67 : vector<16x1xi1> to vector<16x64xi1>
    %69 = arith.select %68, %65, %66 : vector<16x64xi1>, vector<16x64xbf16>
    %c5_39 = arith.constant 5 : index
    %c0_40 = arith.constant 0 : index
    %c0_41 = arith.constant 0 : index
    %70 = vector.load %arg3[%c5_39, %c0_40, %c0_41] : memref<9x64x128xbf16, #tpu.memory_space<vmem>>, vector<1x64x128xbf16>
    %71 = vector.shape_cast %70 : vector<1x64x128xbf16> to vector<64x128xbf16>
    %cst_42 = arith.constant dense<0.000000e+00> : vector<16x128xf32>
    %72 = tpu.matmul %69, %71, %cst_42 {dimension_numbers = #tpu.dot_dimension_numbers<[1], [0], [0], [1], [0, 0, 1, 1], [], []>} : vector<16x64xbf16>, vector<64x128xbf16>, vector<16x128xf32> -> vector<16x128xf32>
    %73 = arith.addf %63, %72 : vector<16x128xf32>
    %c0_43 = arith.constant 0 : index
    %c8 = arith.constant 8 : index
    %c0_44 = arith.constant 0 : index
    %74 = vector.load %arg2[%c0_43, %c8, %c0_44] : memref<1x26x64xbf16, #tpu.memory_space<vmem>>, vector<1x16x64xbf16>
    %75 = vector.shape_cast %74 : vector<1x16x64xbf16> to vector<16x64xbf16>
    %cst_45 = arith.constant 0.000000e+00 : bf16
    %76 = vector.broadcast %cst_45 : bf16 to vector<16x64xbf16>
    %77 = vector.shape_cast %18 : vector<16x1xi1> to vector<16x1xi1>
    %78 = vector.broadcast %77 : vector<16x1xi1> to vector<16x64xi1>
    %79 = arith.select %78, %75, %76 : vector<16x64xi1>, vector<16x64xbf16>
    %c6_46 = arith.constant 6 : index
    %c0_47 = arith.constant 0 : index
    %c0_48 = arith.constant 0 : index
    %80 = vector.load %arg3[%c6_46, %c0_47, %c0_48] : memref<9x64x128xbf16, #tpu.memory_space<vmem>>, vector<1x64x128xbf16>
    %81 = vector.shape_cast %80 : vector<1x64x128xbf16> to vector<64x128xbf16>
    %cst_49 = arith.constant dense<0.000000e+00> : vector<16x128xf32>
    %82 = tpu.matmul %79, %81, %cst_49 {dimension_numbers = #tpu.dot_dimension_numbers<[1], [0], [0], [1], [0, 0, 1, 1], [], []>} : vector<16x64xbf16>, vector<64x128xbf16>, vector<16x128xf32> -> vector<16x128xf32>
    %83 = arith.addf %73, %82 : vector<16x128xf32>
    %c0_50 = arith.constant 0 : index
    %c9 = arith.constant 9 : index
    %c0_51 = arith.constant 0 : index
    %84 = vector.load %arg2[%c0_50, %c9, %c0_51] : memref<1x26x64xbf16, #tpu.memory_space<vmem>>, vector<1x16x64xbf16>
    %85 = vector.shape_cast %84 : vector<1x16x64xbf16> to vector<16x64xbf16>
    %c7 = arith.constant 7 : index
    %c0_52 = arith.constant 0 : index
    %c0_53 = arith.constant 0 : index
    %86 = vector.load %arg3[%c7, %c0_52, %c0_53] : memref<9x64x128xbf16, #tpu.memory_space<vmem>>, vector<1x64x128xbf16>
    %87 = vector.shape_cast %86 : vector<1x64x128xbf16> to vector<64x128xbf16>
    %cst_54 = arith.constant dense<0.000000e+00> : vector<16x128xf32>
    %88 = tpu.matmul %85, %87, %cst_54 {dimension_numbers = #tpu.dot_dimension_numbers<[1], [0], [0], [1], [0, 0, 1, 1], [], []>} : vector<16x64xbf16>, vector<64x128xbf16>, vector<16x128xf32> -> vector<16x128xf32>
    %89 = arith.addf %83, %88 : vector<16x128xf32>
    %c0_55 = arith.constant 0 : index
    %c10 = arith.constant 10 : index
    %c0_56 = arith.constant 0 : index
    %90 = vector.load %arg2[%c0_55, %c10, %c0_56] : memref<1x26x64xbf16, #tpu.memory_space<vmem>>, vector<1x16x64xbf16>
    %91 = vector.shape_cast %90 : vector<1x16x64xbf16> to vector<16x64xbf16>
    %cst_57 = arith.constant 0.000000e+00 : bf16
    %92 = vector.broadcast %cst_57 : bf16 to vector<16x64xbf16>
    %93 = vector.shape_cast %20 : vector<16x1xi1> to vector<16x1xi1>
    %94 = vector.broadcast %93 : vector<16x1xi1> to vector<16x64xi1>
    %95 = arith.select %94, %91, %92 : vector<16x64xi1>, vector<16x64xbf16>
    %c8_58 = arith.constant 8 : index
    %c0_59 = arith.constant 0 : index
    %c0_60 = arith.constant 0 : index
    %96 = vector.load %arg3[%c8_58, %c0_59, %c0_60] : memref<9x64x128xbf16, #tpu.memory_space<vmem>>, vector<1x64x128xbf16>
    %97 = vector.shape_cast %96 : vector<1x64x128xbf16> to vector<64x128xbf16>
    %cst_61 = arith.constant dense<0.000000e+00> : vector<16x128xf32>
    %98 = tpu.matmul %95, %97, %cst_61 {dimension_numbers = #tpu.dot_dimension_numbers<[1], [0], [0], [1], [0, 0, 1, 1], [], []>} : vector<16x64xbf16>, vector<64x128xbf16>, vector<16x128xf32> -> vector<16x128xf32>
    %99 = arith.addf %89, %98 : vector<16x128xf32>
    %c0_62 = arith.constant 0 : index
    %c0_63 = arith.constant 0 : index
    %100 = vector.load %arg4[%c0_62, %c0_63] : memref<1x128xf32, #tpu.memory_space<vmem>>, vector<1x128xf32>
    %101 = vector.broadcast %100 : vector<1x128xf32> to vector<16x128xf32>
    %102 = arith.addf %99, %101 : vector<16x128xf32>
    %c0_64 = arith.constant 0 : index
    %c0_65 = arith.constant 0 : index
    %c0_66 = arith.constant 0 : index
    %103 = vector.load %arg5[%c0_64, %c0_65, %c0_66] : memref<1x16x128xbf16, #tpu.memory_space<vmem>>, vector<1x16x128xbf16>
    %104 = vector.shape_cast %103 : vector<1x16x128xbf16> to vector<16x128xbf16>
    %105 = arith.extf %104 : vector<16x128xbf16> to vector<16x128xf32>
    %106 = arith.addf %102, %105 : vector<16x128xf32>
    %cst_67 = arith.constant 0.000000e+00 : f32
    %107 = vector.broadcast %cst_67 : f32 to vector<16x128xf32>
    %108 = arith.maximumf %106, %107 : vector<16x128xf32>
    %109 = arith.truncf %108 : vector<16x128xf32> to vector<16x128xbf16>
    %c0_68 = arith.constant 0 : index
    %c0_69 = arith.constant 0 : index
    %c0_70 = arith.constant 0 : index
    %110 = vector.load %arg6[%c0_68, %c0_69, %c0_70] : memref<1x16x128xbf16, #tpu.memory_space<vmem>>, vector<1x16x128xbf16>
    %111 = vector.shape_cast %110 : vector<1x16x128xbf16> to vector<16x128xbf16>
    %112 = vector.shape_cast %109 : vector<16x128xbf16> to vector<1x16x128xbf16>
    tpu.vector_store %arg6[%c0_68, %c0_69, %c0_70], %112 {strides = array<i32>} : memref<1x16x128xbf16, #tpu.memory_space<vmem>>, vector<1x16x128xbf16>,
    return
  }
  func.func @transform_0(%arg0: i32, %arg1: i32) -> (i32, i32, i32) {
    %c0_i32 = arith.constant 0 : i32
    %c0_i32_0 = arith.constant 0 : i32
    %c0_i32_1 = arith.constant 0 : i32
    return %arg0, %c0_i32, %c0_i32_0 : i32, i32, i32
  }
  func.func @transform_1(%arg0: i32, %arg1: i32) -> (i32, i32, i32) {
    %c0_i32 = arith.constant 0 : i32
    %c0_i32_0 = arith.constant 0 : i32
    %c0_i32_1 = arith.constant 0 : i32
    return %c0_i32, %c0_i32_0, %arg1 : i32, i32, i32
  }
  func.func @transform_2(%arg0: i32, %arg1: i32) -> (i32, i32) {
    %c0_i32 = arith.constant 0 : i32
    %c0_i32_0 = arith.constant 0 : i32
    return %c0_i32, %arg1 : i32, i32
  }
  func.func @transform_3(%arg0: i32, %arg1: i32) -> (i32, i32, i32) {
    %c0_i32 = arith.constant 0 : i32
    %c0_i32_0 = arith.constant 0 : i32
    return %arg0, %c0_i32, %arg1 : i32, i32, i32
  }
  func.func @transform_4(%arg0: i32, %arg1: i32) -> (i32, i32, i32) {
    %c0_i32 = arith.constant 0 : i32
    %c0_i32_0 = arith.constant 0 : i32
    return %arg0, %c0_i32, %arg1 : i32, i32, i32
  }
}

</mosaic_0001>

<llo_original>
// kernel: tpu_custom_call.1
$region0: #{tpu_custom_call.1}
  #allocation0 [shape = 'u32[]', space=smem, size = 0x4, offset = 0x4, fixed_abs, tag = 'smem constant byte address 0x4 - core index']
  #allocation1 [shape = 'u32[144,128]{1,0:T(1,128)}', space=vmem, size = 0x12000, scoped, tag = 'internal scratch']
  %s0 = inlined_call_operand.vmem [shape: bf16[2,26,64], index: 0, kind: input, shape index: {}]
  %s1 = inlined_call_operand.hbm [shape: bf16[9,64,128], index: 1, kind: input, shape index: {}]
  %s2 = inlined_call_operand.vmem [shape: f32[1,128], index: 2, kind: input, shape index: {}]
  %s3 = inlined_call_operand.vmem [shape: bf16[2,16,128], index: 3, kind: input, shape index: {}]
  %s4 = inlined_call_operand.hbm [shape: bf16[2,16,128], index: 4, kind: output, shape index: {}]
  %s5 = sld [smem:[#allocation0]]
  $region53: #{tpu_custom_call.1} parent=0
    _
  %s7 = ssub.s32 1, %s5
  %s8 = scalar_select 0, %s7, %s5
  $region1: #{tpu_custom_call.1} parent=0
    #allocation2 [shape = 'u8[147456]{0}', space=vmem, size = 0x24000, scoped, tag = 'input window, operand 1, single buffered']
    #allocation3 [shape = 's32[2]{0}', space=sflag, size = 0x8, scoped, tag = 'scoped memory for tpu_custom_call.1']
    #allocation4 [shape = 's32[2]{0}', space=sflag, size = 0x8, scoped, tag = 'scoped memory for tpu_custom_call.1']
    #allocation5 [shape = 'u8[8192]{0}', space=vmem, size = 0x2000, scoped, tag = 'output window, operand 0']
    %9 = vsyncpa [#allocation3], 0
    %10 = vsyncpa [#allocation4], 0
    %s11 = scalar_lea.sflag [#allocation4], 1
    %12 = vsyncpa %s11, 0
    loop: start=0, step=1, limit=4
    $region2: #{tpu_custom_call.1} parent=1 // loop_pre_header
      _
    $region3: #{tpu_custom_call.1} parent=1 // loop_header
      %s14 = sphi 0, %s18
      %p15 = scmp.ge.s32.totalorder %s14, 4
      %s21 = sphi 0, %s33
      %s22 = sphi 0, %s29
      %s23 = sphi 0, %s21
      %s24 = sphi 0, %s22
      %s25 = sphi 0, %s23
      %s26 = sphi 0, %s24
      %s36 = sphi 0, %s38
      %s39 = sphi 0, %s36
      %s40 = sphi 0, %s39
      %s56 = sphi 0, %s40
      %s62 = sphi 0, %s64
      %s65 = sphi 0, %s62
      %s66 = sphi 0, %s65
      %s82 = sphi 0, %s66
      %s88 = sphi 0, %s90
      %s91 = sphi 0, %s88
      %s92 = sphi 0, %s91
      %s108 = sphi 0, %s92
      %s116 = sphi 0, %s118
      %s119 = sphi 0, %s116
      %s120 = sphi 0, %s119
      %s136 = sphi 0, %s120
      %s144 = sphi 0, %s146
      %s147 = sphi 0, %s144
      %s148 = sphi 0, %s147
      %s164 = sphi 0, %s148
    $region4: #{tpu_custom_call.1} parent=1 // loop_header_branch
      %17 = sbr.rel (%p15) target = $region8
    $region5: #{tpu_custom_call.1} parent=1 // loop_body
      %s19 = ssub.s32 %s14, 1
      %s20 = ssub.s32 %s14, 2
      %s27 = sadd.s32 1, %s22
      %p28 = scmp.ge.s32.totalorder %s27, 1
      %s29 = scalar_select %p28, 0, %s27
      %s30 = sadd.s32 1, %s21
      %s31 = scalar_select %p28, %s30, %s21
      %p32 = scmp.ge.s32.totalorder %s31, 2
      %s33 = scalar_select %p32, 0, %s31
      %s34 = ssub.s32 %s21, %s33
      %p35 = scmp.eq.s32.totalorder %s34, 0
      %s37 = sadd.s32 %s36, 1
      %s38 = scalar_select %p35, %s36, %s37
      %p41 = pneg %p35
      %p42 = scmp.eq.s32.totalorder %s14, 1
      %p43 = por %p41, %p42
      %p44 = scmp.ne.s32.totalorder %s36, %s39
      %p45 = scmp.eq.s32.totalorder %s14, 0
      %p46 = por %p44, %p45
      %p47 = scmp.ne.s32.totalorder %s36, %s39
      %p48 = scmp.eq.s32.totalorder %s19, 1
      %p49 = por %p47, %p48
      %p50 = scmp.ne.s32.totalorder %s39, %s40
      %p51 = scmp.eq.s32.totalorder %s19, 0
      %p52 = por %p50, %p51
      %p53 = scmp.ne.s32.totalorder %s39, %s40
      %p54 = scmp.eq.s32.totalorder %s20, 1
      %p55 = por %p53, %p54
      %p57 = scmp.ne.s32.totalorder %s40, %s56
      %p58 = scmp.eq.s32.totalorder %s20, 0
      %p59 = por %p57, %p58
      %s60 = ssub.s32 %s22, %s29
      %p61 = scmp.eq.s32.totalorder %s60, 0
      %s63 = sadd.s32 %s62, 1
      %s64 = scalar_select %p61, %s62, %s63
      %p67 = pneg %p61
      %p68 = scmp.eq.s32.totalorder %s14, 1
      %p69 = por %p67, %p68
      %p70 = scmp.ne.s32.totalorder %s62, %s65
      %p71 = scmp.eq.s32.totalorder %s14, 0
      %p72 = por %p70, %p71
      %p73 = scmp.ne.s32.totalorder %s62, %s65
      %p74 = scmp.eq.s32.totalorder %s19, 1
      %p75 = por %p73, %p74
      %p76 = scmp.ne.s32.totalorder %s65, %s66
      %p77 = scmp.eq.s32.totalorder %s19, 0
      %p78 = por %p76, %p77
      %p79 = scmp.ne.s32.totalorder %s65, %s66
      %p80 = scmp.eq.s32.totalorder %s20, 1
      %p81 = por %p79, %p80
      %p83 = scmp.ne.s32.totalorder %s66, %s82
      %p84 = scmp.eq.s32.totalorder %s20, 0
      %p85 = por %p83, %p84
      %s86 = ssub.s32 %s22, %s29
      %p87 = scmp.eq.s32.totalorder %s86, 0
      %s89 = sadd.s32 %s88, 1
      %s90 = scalar_select %p87, %s88, %s89
      %p93 = pneg %p87
      %p94 = scmp.eq.s32.totalorder %s14, 1
      %p95 = por %p93, %p94
      %p96 = scmp.ne.s32.totalorder %s88, %s91
      %p97 = scmp.eq.s32.totalorder %s14, 0
      %p98 = por %p96, %p97
      %p99 = scmp.ne.s32.totalorder %s88, %s91
      %p100 = scmp.eq.s32.totalorder %s19, 1
      %p101 = por %p99, %p100
      %p102 = scmp.ne.s32.totalorder %s91, %s92
      %p103 = scmp.eq.s32.totalorder %s19, 0
      %p104 = por %p102, %p103
      %p105 = scmp.ne.s32.totalorder %s91, %s92
      %p106 = scmp.eq.s32.totalorder %s20, 1
      %p107 = por %p105, %p106
      %p109 = scmp.ne.s32.totalorder %s92, %s108
      %p110 = scmp.eq.s32.totalorder %s20, 0
      %p111 = por %p109, %p110
      %s112 = ssub.s32 %s21, %s33
      %s113 = ssub.s32 %s22, %s29
      %s114 = sor.u32 %s112, %s113
      %p115 = scmp.eq.s32.totalorder %s114, 0
      %s117 = sadd.s32 %s116, 1
      %s118 = scalar_select %p115, %s116, %s117
      %p121 = pneg %p115
      %p122 = scmp.eq.s32.totalorder %s14, 1
      %p123 = por %p121, %p122
      %p124 = scmp.ne.s32.totalorder %s116, %s119
      %p125 = scmp.eq.s32.totalorder %s14, 0
      %p126 = por %p124, %p125
      %p127 = scmp.ne.s32.totalorder %s116, %s119
      %p128 = scmp.eq.s32.totalorder %s19, 1
      %p129 = por %p127, %p128
      %p130 = scmp.ne.s32.totalorder %s119, %s120
      %p131 = scmp.eq.s32.totalorder %s19, 0
      %p132 = por %p130, %p131
      %p133 = scmp.ne.s32.totalorder %s119, %s120
      %p134 = scmp.eq.s32.totalorder %s20, 1
      %p135 = por %p133, %p134
      %p137 = scmp.ne.s32.totalorder %s120, %s136
      %p138 = scmp.eq.s32.totalorder %s20, 0
      %p139 = por %p137, %p138
      %s140 = ssub.s32 %s21, %s33
      %s141 = ssub.s32 %s22, %s29
      %s142 = sor.u32 %s140, %s141
      %p143 = scmp.eq.s32.totalorder %s142, 0
      %s145 = sadd.s32 %s144, 1
      %s146 = scalar_select %p143, %s144, %s145
      %p149 = pneg %p143
      %p150 = scmp.eq.s32.totalorder %s14, 1
      %p151 = por %p149, %p150
      %p152 = scmp.ne.s32.totalorder %s144, %s147
      %p153 = scmp.eq.s32.totalorder %s14, 0
      %p154 = por %p152, %p153
      %p155 = scmp.ne.s32.totalorder %s144, %s147
      %p156 = scmp.eq.s32.totalorder %s19, 1
      %p157 = por %p155, %p156
      %p158 = scmp.ne.s32.totalorder %s147, %s148
      %p159 = scmp.eq.s32.totalorder %s19, 0
      %p160 = por %p158, %p159
      %p161 = scmp.ne.s32.totalorder %s147, %s148
      %p162 = scmp.eq.s32.totalorder %s20, 1
      %p163 = por %p161, %p162
      %p165 = scmp.ne.s32.totalorder %s148, %s164
      %p166 = scmp.eq.s32.totalorder %s20, 0
      %p167 = por %p165, %p166
      %p168 = scmp.le.s32.totalorder 1, %s14
      %p169 = scmp.lt.s32.totalorder %s14, 3
      %p170 = pnand %p168, %p169
      %p171 = pneg %p170
      // Predicated region
      $region9: #{tpu_custom_call.1} parent=5 // pred_check
        _
      $region10: #{tpu_custom_call.1} parent=5 // pred_check_branch
        %173 = sbr.rel (%p170) target = $region12
      $region11: #{tpu_custom_call.1} parent=5 // pred_region
        %s174 = ssub.s32 %s14, 1
        // Predicated region
        $region13: #{tpu_custom_call.1} parent=11 // pred_check
          %p175 = pneg %p78
        $region14: #{tpu_custom_call.1} parent=11 // pred_check_branch
          %177 = sbr.rel (%p175) target = $region16
        $region15: #{tpu_custom_call.1} parent=11 // pred_region
          %s179 = ssub.s32 4608, 4608
          %180 = vsyncadd [#allocation3], %s179
          %s181 = smul.addr %s24, 64
          %s182 = scalar_lea.hbm %s1, %s181
          %s183 = sshll.u32 [#allocation2], 4
          %s184 = int_to_ptr.vmem [resolvable:$true] %s183
          %189 = dma.hbm_to_vmem [thread:$0]  %s182, 4608, %s184, [#allocation3], 64, 64, 4
        $region16: #{tpu_custom_call.1} parent=11 // pred_fallthru
          _
        // Predicated region
        $region17: #{tpu_custom_call.1} parent=11 // pred_check
          %p190 = pneg %p104
        $region18: #{tpu_custom_call.1} parent=11 // pred_check_branch
          %192 = sbr.rel (%p190) target = $region20
        $region19: #{tpu_custom_call.1} parent=11 // pred_region
          %p193 = scmp.lt.s32.totalorder %s24, 0
          %s194 = scalar_select %p193, %s24, 0
          %s195 = scalar_lea.vmem %s2, %s194
        $region20: #{tpu_custom_call.1} parent=11 // pred_fallthru
          _
      $region12: #{tpu_custom_call.1} parent=5 // pred_fallthru
        _
      %p196 = scmp.lt.s32.totalorder %s14, 2
      // Predicated region
      $region21: #{tpu_custom_call.1} parent=5 // pred_check
        %p197 = pneg %p196
      $region22: #{tpu_custom_call.1} parent=5 // pred_check_branch
        %199 = sbr.rel (%p197) target = $region24
      $region23: #{tpu_custom_call.1} parent=5 // pred_region
        // Predicated region
        $region25: #{tpu_custom_call.1} parent=23 // pred_check
          %p200 = pneg %p46
        $region26: #{tpu_custom_call.1} parent=23 // pred_check_branch
          %202 = sbr.rel (%p200) target = $region28
        $region27: #{tpu_custom_call.1} parent=23 // pred_region
          %p203 = scmp.lt.s32.totalorder %s21, 1
          %s204 = scalar_select %p203, %s21, 1
          %s205 = smul.addr %s204, 4
          %s206 = smul.addr %s205, 4
          %s207 = scalar_lea.vmem %s0, %s206
        $region28: #{tpu_custom_call.1} parent=23 // pred_fallthru
          _
        // Predicated region
        $region29: #{tpu_custom_call.1} parent=23 // pred_check
          %p208 = pneg %p126
        $region30: #{tpu_custom_call.1} parent=23 // pred_check_branch
          %210 = sbr.rel (%p208) target = $region32
        $region31: #{tpu_custom_call.1} parent=23 // pred_region
          %p211 = scmp.lt.s32.totalorder %s21, 1
          %s212 = scalar_select %p211, %s21, 1
          %p213 = scmp.lt.s32.totalorder %s22, 0
          %s214 = scalar_select %p213, %s22, 0
          %s215 = smul.addr %s212, 2
          %s216 = sadd.s32 %s214, %s215
          %s217 = smul.addr %s216, 4
          %s218 = scalar_lea.vmem %s3, %s217
        $region32: #{tpu_custom_call.1} parent=23 // pred_fallthru
          _
      $region24: #{tpu_custom_call.1} parent=5 // pred_fallthru
        _
      %p219 = scmp.le.s32.totalorder 1, %s14
      %p220 = scmp.lt.s32.totalorder %s14, 3
      %p221 = pnand %p219, %p220
      %p222 = pneg %p221
      // Predicated region
      $region33: #{tpu_custom_call.1} parent=5 // pred_check
        _
      $region34: #{tpu_custom_call.1} parent=5 // pred_check_branch
        %224 = sbr.rel (%p221) target = $region36
      $region35: #{tpu_custom_call.1} parent=5 // pred_region
        %s225 = ssub.s32 %s14, 1
        // Predicated region
        $region37: #{tpu_custom_call.1} parent=35 // pred_check
          %p226 = pneg %p78
        $region38: #{tpu_custom_call.1} parent=35 // pred_check_branch
          %228 = sbr.rel (%p226) target = $region40
        $region39: #{tpu_custom_call.1} parent=35 // pred_region
          %229 = dma.done [#allocation3], 4608
        $region40: #{tpu_custom_call.1} parent=35 // pred_fallthru
          _
        %p230 = scmp.lt.s32.totalorder %s23, 1
        %s231 = scalar_select %p230, %s23, 1
        %s232 = smul.addr %s231, 4
        %s233 = smul.addr %s232, 4
        %s234 = scalar_lea.vmem %s0, %s233
        %p235 = pneg %p52
        %p236 = pneg %p49
        %p237 = pneg %p78
        %p238 = pneg %p75
        %p239 = scmp.lt.s32.totalorder %s24, 0
        %s240 = scalar_select %p239, %s24, 0
        %s241 = scalar_lea.vmem %s2, %s240
        %p242 = pneg %p104
        %p243 = pneg %p101
        %p244 = scmp.lt.s32.totalorder %s23, 1
        %s245 = scalar_select %p244, %s23, 1
        %p246 = scmp.lt.s32.totalorder %s24, 0
        %s247 = scalar_select %p246, %s24, 0
        %s248 = smul.addr %s245, 2
        %s249 = sadd.s32 %s247, %s248
        %s250 = smul.addr %s249, 4
        %s251 = scalar_lea.vmem %s3, %s250
        %p252 = pneg %p132
        %p253 = pneg %p129
        %p254 = pneg %p160
        %p255 = pneg %p157
        %s256 = sand.u32 %s147, 1
        %s257 = scalar_lea.sflag [#allocation4], %s256
        %s258 = sand.u32 %s147, 1
        %s259 = smul.addr %s258, 8
        %s260 = scalar_lea.vmem [#allocation5], %s259
        %p261 = scmp.lt.s32.totalorder %s23, 1
        %s262 = scalar_select %p261, %s23, 1
        %s263 = smul.addr %s262, 4
        %s264 = smul.addr %s263, 4
        %s265 = scalar_lea.vmem %s0, %s264
        %p266 = scmp.lt.s32.totalorder %s24, 0
        %s267 = scalar_select %p266, %s24, 0
        %s268 = scalar_lea.vmem %s2, %s267
        %p269 = scmp.lt.s32.totalorder %s23, 1
        %s270 = scalar_select %p269, %s23, 1
        %p271 = scmp.lt.s32.totalorder %s24, 0
        %s272 = scalar_select %p271, %s24, 0
        %s273 = smul.addr %s270, 2
        %s274 = sadd.s32 %s272, %s273
        %s275 = smul.addr %s274, 4
        %s276 = scalar_lea.vmem %s3, %s275
        %v280 = vlaneseq
        %v281 = vshrl.u32 %v280, 7
        %v282 = vadd.s32 %v281, 8
        %vm283 = vcmp.lt.s32.totalorder %v281, 0
        %v284 = vsub.s32 0, %v281
        %v285 = vsel %vm283, %v284, %v281
        %v286 = vshrl.u32 %v285, 2
        %v287 = vand.u32 %v285, 3
        %v288 = vsub.s32 0, %v287
        %v289 = vsel %vm283, %v288, %v287
        %vm290 = vcmp.lt.s32.totalorder %v282, 0
        %v291 = vsub.s32 0, %v282
        %v292 = vsel %vm290, %v291, %v282
        %v293 = vshrl.u32 %v292, 2
        %v294 = vand.u32 %v292, 3
        %v295 = vsub.s32 0, %v294
        %v296 = vsel %vm290, %v295, %v294
        %vm297 = vcmp.ne.s32.totalorder %v289, 0
        %vm298 = vcmp.ne.s32.totalorder %v296, 0
        %vm299 = vcmp.lt.s32.totalorder %v289, 0
        %vm300 = vcmp.lt.s32.totalorder %v296, 0
        %vm301 = vmand %vm299, %vm297
        %vm302 = vmand %vm300, %vm298
        %v303 = vadd.s32 %v289, 4
        %v304 = vadd.s32 %v296, 4
        %v305 = vsel %vm301, %v303, %v289
        %v306 = vsel %vm302, %v304, %v296
        %vm307 = vcmp.ne.s32.totalorder %v305, 0
        %vm308 = vcmp.ne.s32.totalorder %v306, 0
        %vm309 = vcmp.ne.s32.totalorder %v305, 3
        %vm310 = vcmp.ne.s32.totalorder %v306, 3
        %v311 = vld [vmem:[%s265] sm:$0xf]
        %v312 = vld [vmem:[%s265 + $0x4] sm:$0xf]
        %v313 = vsel %vm307, 1, 0
        %v314 = vsel %vm308, 1, 0
        %vm315 = vcmp.eq.s32.totalorder %v313, 1
        %vm316 = vcmp.eq.s32.totalorder %v314, 1
        %vm317 = vmpackc.low %vm315, %vm315
        %vm318 = vmpackc.low %vm316, %vm316
        %v319 = vsel %vm317, %v311, 0
        %v320 = vsel %vm318, %v312, 0
        %v321 = vld [vmem:[#allocation2] sm:$0xf]
        %v322 = vld [vmem:[#allocation2 + $0x4] sm:$0xf]
        %v323 = vld [vmem:[#allocation2 + $0x8] sm:$0xf]
        %v324 = vld [vmem:[#allocation2 + $0xc] sm:$0xf]
        %v325 = vld [vmem:[#allocation2 + $0x10] sm:$0xf]
        %v326 = vld [vmem:[#allocation2 + $0x14] sm:$0xf]
        %v327 = vld [vmem:[#allocation2 + $0x18] sm:$0xf]
        %v328 = vld [vmem:[#allocation2 + $0x1c] sm:$0xf]
        %v329 = vld [vmem:[%s265 + $0x8] sm:$0x1]
        %s330 = scalar_lea.vmem [#allocation2], 32
        %v331 = vld [vmem:[%s330] sm:$0xf]
        %v332 = vld [vmem:[%s330 + $0x4] sm:$0xf]
        %v333 = vld [vmem:[%s330 + $0x8] sm:$0xf]
        %v334 = vld [vmem:[%s330 + $0xc] sm:$0xf]
        %v335 = vld [vmem:[%s330 + $0x10] sm:$0xf]
        %v336 = vld [vmem:[%s330 + $0x14] sm:$0xf]
        %v337 = vld [vmem:[%s330 + $0x18] sm:$0xf]
        %v338 = vld [vmem:[%s330 + $0x1c] sm:$0xf]
        %v342 = vunpack.c.l.b16 %v311
        %v343 = vunpack.c.l.b16 %v312
        %v344 = vunpack.c.l.b16 %v329
        %v345 = vpack.c.b16 %v343, %v342
        %v346 = vpack.c.b16 %v344, %v344
        %vm347 = vsmask.f32 7424
        %v349 = vshrl.u32 %v345, 16
        %v351 = vshll.u32 %v345, 16
        %v353 = vrot.slane %v351, 1
        %v354 = vor.u32 %v349, %v353
        %v356 = vshll.u32 %v346, 16
        %v358 = vrot.slane %v356, 1
        %v359 = vsel %vm347, %v354, %v358
        %v368 = vunpack.c.l.b16 %v331
        %v369 = vunpack.c.l.b16 %v332
        %v370 = vunpack.c.l.b16 %v333
        %v371 = vunpack.c.l.b16 %v334
        %v372 = vunpack.c.l.b16 %v335
        %v373 = vunpack.c.l.b16 %v336
        %v374 = vunpack.c.l.b16 %v337
        %v375 = vunpack.c.l.b16 %v338
        %v376 = vpack.c.b16 %v369, %v368
        %v377 = vpack.c.b16 %v371, %v370
        %v378 = vpack.c.b16 %v373, %v372
        %v379 = vpack.c.b16 %v375, %v374
        %vm384 = vcmask 523264
        %v386 = vsel %vm384, %v359, 0
        %388 = vmatprep.subr.bf16.mxu0 0
        %389 = vmatpush1.bf16.msra.mxu0 0
        %390 = vmatprep.subr.bf16.mxu0 0
        %391 = vmatpush1.bf16.msra.mxu0 0
        %392 = vmatprep.subr.bf16.mxu0 0
        %393 = vmatpush1.bf16.msra.mxu0 0
        %394 = vmatprep.subr.bf16.mxu0 0
        %395 = vmatpush1.bf16.msra.mxu0 0
        %396 = vmatprep.subr.bf16.mxu0 0
        %397 = vmatpush1.bf16.msra.mxu0 %v379
        %398 = vmatprep.subr.bf16.mxu0 0
        %399 = vmatpush1.bf16.msra.mxu0 %v378
        %400 = vmatprep.subr.bf16.mxu0 0
        %401 = vmatpush1.bf16.msra.mxu0 %v377
        %402 = vmatprep.subr.bf16.mxu0 0
        %403 = vmatpush1.bf16.msra.mxu0 %v376
        %404 = vmatprep.subr.bf16.mxu0 0
        %405 = vmatpush2.bf16.msra.mxu0 0
        %406 = vmatprep.subr.bf16.mxu0 0
        %407 = vmatpush2.bf16.msra.mxu0 0
        %408 = vmatprep.subr.bf16.mxu0 0
        %409 = vmatpush2.bf16.msra.mxu0 0
        %410 = vmatprep.subr.bf16.mxu0 0
        %411 = vmatpush2.bf16.msra.mxu0 0
        %412 = vmatprep.subr.bf16.mxu0 0
        %413 = vmatpush2.bf16.msra.mxu0 0
        %414 = vmatprep.subr.bf16.mxu0 0
        %415 = vmatpush2.bf16.msra.mxu0 0
        %416 = vmatprep.subr.bf16.mxu0 0
        %417 = vmatpush2.bf16.msra.mxu0 0
        %418 = vmatprep.subr.bf16.mxu0 0
        %419 = vmatpush2.bf16.msra.mxu0 0
        %420 = vmatprep.mubr.bf16.mxu0 0
        %421 = vmatmul.mubr.bf16.gmra.mxu0 %v386
        %v422 = vpop.f32.mrf.mxu0
        %v423 = vadd.f32 0.0, %v422
        %v424 = vpop.f32.mrf.mxu0
        %v425 = vpop.f32.mrf.mxu0
        %v426 = vadd.f32 0.0, %v425
        %v427 = vpop.f32.mrf.mxu0
        %428 = vdwg.mxu0
        %v431 = vunpack.c.l.b16 %v319
        %v432 = vunpack.c.l.b16 %v320
        %v433 = vpack.c.b16 %v432, %v431
        %v442 = vunpack.c.l.b16 %v321
        %v443 = vunpack.c.l.b16 %v322
        %v444 = vunpack.c.l.b16 %v323
        %v445 = vunpack.c.l.b16 %v324
        %v446 = vunpack.c.l.b16 %v325
        %v447 = vunpack.c.l.b16 %v326
        %v448 = vunpack.c.l.b16 %v327
        %v449 = vunpack.c.l.b16 %v328
        %v450 = vpack.c.b16 %v443, %v442
        %v451 = vpack.c.b16 %v445, %v444
        %v452 = vpack.c.b16 %v447, %v446
        %v453 = vpack.c.b16 %v449, %v448
        %v459 = vsel %vm384, %v433, 0
        %461 = vmatprep.subr.bf16.mxu0 0
        %462 = vmatpush1.bf16.msra.mxu0 0
        %463 = vmatprep.subr.bf16.mxu0 0
        %464 = vmatpush1.bf16.msra.mxu0 0
        %465 = vmatprep.subr.bf16.mxu0 0
        %466 = vmatpush1.bf16.msra.mxu0 0
        %467 = vmatprep.subr.bf16.mxu0 0
        %468 = vmatpush1.bf16.msra.mxu0 0
        %469 = vmatprep.subr.bf16.mxu0 0
        %470 = vmatpush1.bf16.msra.mxu0 %v453
        %471 = vmatprep.subr.bf16.mxu0 0
        %472 = vmatpush1.bf16.msra.mxu0 %v452
        %473 = vmatprep.subr.bf16.mxu0 0
        %474 = vmatpush1.bf16.msra.mxu0 %v451
        %475 = vmatprep.subr.bf16.mxu0 0
        %476 = vmatpush1.bf16.msra.mxu0 %v450
        %477 = vmatprep.subr.bf16.mxu0 0
        %478 = vmatpush2.bf16.msra.mxu0 0
        %479 = vmatprep.subr.bf16.mxu0 0
        %480 = vmatpush2.bf16.msra.mxu0 0
        %481 = vmatprep.subr.bf16.mxu0 0
        %482 = vmatpush2.bf16.msra.mxu0 0
        %483 = vmatprep.subr.bf16.mxu0 0
        %484 = vmatpush2.bf16.msra.mxu0 0
        %485 = vmatprep.subr.bf16.mxu0 0
        %486 = vmatpush2.bf16.msra.mxu0 0
        %487 = vmatprep.subr.bf16.mxu0 0
        %488 = vmatpush2.bf16.msra.mxu0 0
        %489 = vmatprep.subr.bf16.mxu0 0
        %490 = vmatpush2.bf16.msra.mxu0 0
        %491 = vmatprep.subr.bf16.mxu0 0
        %492 = vmatpush2.bf16.msra.mxu0 0
        %493 = vmatprep.mubr.bf16.mxu0 0
        %494 = vmatmul.mubr.bf16.gmra.mxu0 %v459
        %v495 = vpop.f32.mrf.mxu0
        %v496 = vadd.f32 %v423, %v495
        %v497 = vpop.f32.mrf.mxu0
        %v498 = vpop.f32.mrf.mxu0
        %v499 = vadd.f32 %v426, %v498
        %v500 = vpop.f32.mrf.mxu0
        %501 = vdwg.mxu0
        %v502 = vld [vmem:[%s265] sm:$0xe]
        %v503 = vsel %vm309, 1, 0
        %v504 = vsel %vm310, 1, 0
        %vm505 = vcmp.eq.s32.totalorder %v503, 1
        %vm506 = vcmp.eq.s32.totalorder %v504, 1
        %vm507 = vmpackc.low %vm505, %vm505
        %vm508 = vmpackc.low %vm506, %vm506
        %v509 = vsel %vm507, 65537, 0
        %v510 = vsel %vm508, 65537, 0
        %vm511 = vcmask 1040384
        %vm512 = vcmask 1044484
        %vm513 = vmor %vm511, %vm512
        %v514 = vrot.slane %v509, 7
        %v515 = vrot.slane %v514, 4
        %v516 = vrot.slane %v510, 7
        %v517 = vsel %vm513, %v515, %v516
        %v518 = vrot.slane %v516, 4
        %vm519 = vcmp.ne.s16.totalorder %v514, 0
        %vm520 = vcmp.ne.s16.totalorder %v517, 0
        %vm521 = vcmp.ne.s16.totalorder %v518, 0
        %v522 = vsel %vm519, %v502, 0
        %v523 = vsel %vm520, %v312, 0
        %v524 = vsel %vm521, %v329, 0
        %s525 = scalar_lea.vmem [#allocation2], 64
        %v526 = vld [vmem:[%s525] sm:$0xf]
        %v527 = vld [vmem:[%s525 + $0x4] sm:$0xf]
        %v528 = vld [vmem:[%s525 + $0x8] sm:$0xf]
        %v529 = vld [vmem:[%s525 + $0xc] sm:$0xf]
        %v530 = vld [vmem:[%s525 + $0x10] sm:$0xf]
        %v531 = vld [vmem:[%s525 + $0x14] sm:$0xf]
        %v532 = vld [vmem:[%s525 + $0x18] sm:$0xf]
        %v533 = vld [vmem:[%s525 + $0x1c] sm:$0xf]
        %v537 = vunpack.c.l.b16 %v522
        %v538 = vunpack.c.l.b16 %v523
        %v539 = vunpack.c.l.b16 %v524
        %v540 = vpack.c.b16 %v538, %v537
        %v541 = vpack.c.b16 %v539, %v539
        %vm542 = vcmask 1046528
        %v543 = vrot.slane %v540, 1
        %v544 = vrot.slane %v541, 1
        %v545 = vsel %vm542, %v543, %v544
        %v554 = vunpack.c.l.b16 %v526
        %v555 = vunpack.c.l.b16 %v527
        %v556 = vunpack.c.l.b16 %v528
        %v557 = vunpack.c.l.b16 %v529
        %v558 = vunpack.c.l.b16 %v530
        %v559 = vunpack.c.l.b16 %v531
        %v560 = vunpack.c.l.b16 %v532
        %v561 = vunpack.c.l.b16 %v533
        %v562 = vpack.c.b16 %v555, %v554
        %v563 = vpack.c.b16 %v557, %v556
        %v564 = vpack.c.b16 %v559, %v558
        %v565 = vpack.c.b16 %v561, %v560
        %v571 = vsel %vm384, %v545, 0
        %573 = vmatprep.subr.bf16.mxu0 0
        %574 = vmatpush1.bf16.msra.mxu0 0
        %575 = vmatprep.subr.bf16.mxu0 0
        %576 = vmatpush1.bf16.msra.mxu0 0
        %577 = vmatprep.subr.bf16.mxu0 0
        %578 = vmatpush1.bf16.msra.mxu0 0
        %579 = vmatprep.subr.bf16.mxu0 0
        %580 = vmatpush1.bf16.msra.mxu0 0
        %581 = vmatprep.subr.bf16.mxu0 0
        %582 = vmatpush1.bf16.msra.mxu0 %v565
        %583 = vmatprep.subr.bf16.mxu0 0
        %584 = vmatpush1.bf16.msra.mxu0 %v564
        %585 = vmatprep.subr.bf16.mxu0 0
        %586 = vmatpush1.bf16.msra.mxu0 %v563
        %587 = vmatprep.subr.bf16.mxu0 0
        %588 = vmatpush1.bf16.msra.mxu0 %v562
        %589 = vmatprep.subr.bf16.mxu0 0
        %590 = vmatpush2.bf16.msra.mxu0 0
        %591 = vmatprep.subr.bf16.mxu0 0
        %592 = vmatpush2.bf16.msra.mxu0 0
        %593 = vmatprep.subr.bf16.mxu0 0
        %594 = vmatpush2.bf16.msra.mxu0 0
        %595 = vmatprep.subr.bf16.mxu0 0
        %596 = vmatpush2.bf16.msra.mxu0 0
        %597 = vmatprep.subr.bf16.mxu0 0
        %598 = vmatpush2.bf16.msra.mxu0 0
        %599 = vmatprep.subr.bf16.mxu0 0
        %600 = vmatpush2.bf16.msra.mxu0 0
        %601 = vmatprep.subr.bf16.mxu0 0
        %602 = vmatpush2.bf16.msra.mxu0 0
        %603 = vmatprep.subr.bf16.mxu0 0
        %604 = vmatpush2.bf16.msra.mxu0 0
        %605 = vmatprep.mubr.bf16.mxu0 0
        %606 = vmatmul.mubr.bf16.gmra.mxu0 %v571
        %v607 = vpop.f32.mrf.mxu0
        %v608 = vadd.f32 0.0, %v607
        %v609 = vpop.f32.mrf.mxu0
        %v610 = vpop.f32.mrf.mxu0
        %v611 = vadd.f32 0.0, %v610
        %v612 = vpop.f32.mrf.mxu0
        %613 = vdwg.mxu0
        %v614 = vadd.f32 %v496, %v608
        %v615 = vadd.f32 %v499, %v611
        %v616 = vld [vmem:[%s265] sm:$0xc]
        %v617 = vld [vmem:[%s265 + $0x8] sm:$0x3]
        %v618 = vsel %vm317, 65537, 0
        %v619 = vsel %vm318, 65537, 0
        %vm620 = vcmask 1041408
        %vm621 = vcmask 1045508
        %vm622 = vmor %vm620, %vm621
        %v623 = vrot.slane %v618, 6
        %v624 = vrot.slane %v623, 4
        %v625 = vrot.slane %v619, 6
        %v626 = vsel %vm622, %v624, %v625
        %v627 = vrot.slane %v625, 4
        %vm628 = vcmp.ne.s16.totalorder %v623, 0
        %vm629 = vcmp.ne.s16.totalorder %v626, 0
        %vm630 = vcmp.ne.s16.totalorder %v627, 0
        %v631 = vsel %vm628, %v616, 0
        %v632 = vsel %vm629, %v312, 0
        %v633 = vsel %vm630, %v617, 0
        %s634 = scalar_lea.vmem [#allocation2], 96
        %v635 = vld [vmem:[%s634] sm:$0xf]
        %v636 = vld [vmem:[%s634 + $0x4] sm:$0xf]
        %v637 = vld [vmem:[%s634 + $0x8] sm:$0xf]
        %v638 = vld [vmem:[%s634 + $0xc] sm:$0xf]
        %v639 = vld [vmem:[%s634 + $0x10] sm:$0xf]
        %v640 = vld [vmem:[%s634 + $0x14] sm:$0xf]
        %v641 = vld [vmem:[%s634 + $0x18] sm:$0xf]
        %v642 = vld [vmem:[%s634 + $0x1c] sm:$0xf]
        %v646 = vunpack.c.l.b16 %v631
        %v647 = vunpack.c.l.b16 %v632
        %v648 = vunpack.c.l.b16 %v633
        %v649 = vpack.c.b16 %v647, %v646
        %v650 = vpack.c.b16 %v648, %v648
        %vm651 = vcmask 1045504
        %v652 = vrot.slane %v649, 2
        %v653 = vrot.slane %v650, 2
        %v654 = vsel %vm651, %v652, %v653
        %v663 = vunpack.c.l.b16 %v635
        %v664 = vunpack.c.l.b16 %v636
        %v665 = vunpack.c.l.b16 %v637
        %v666 = vunpack.c.l.b16 %v638
        %v667 = vunpack.c.l.b16 %v639
        %v668 = vunpack.c.l.b16 %v640
        %v669 = vunpack.c.l.b16 %v641
        %v670 = vunpack.c.l.b16 %v642
        %v671 = vpack.c.b16 %v664, %v663
        %v672 = vpack.c.b16 %v666, %v665
        %v673 = vpack.c.b16 %v668, %v667
        %v674 = vpack.c.b16 %v670, %v669
        %v680 = vsel %vm384, %v654, 0
        %682 = vmatprep.subr.bf16.mxu0 0
        %683 = vmatpush1.bf16.msra.mxu0 0
        %684 = vmatprep.subr.bf16.mxu0 0
        %685 = vmatpush1.bf16.msra.mxu0 0
        %686 = vmatprep.subr.bf16.mxu0 0
        %687 = vmatpush1.bf16.msra.mxu0 0
        %688 = vmatprep.subr.bf16.mxu0 0
        %689 = vmatpush1.bf16.msra.mxu0 0
        %690 = vmatprep.subr.bf16.mxu0 0
        %691 = vmatpush1.bf16.msra.mxu0 %v674
        %692 = vmatprep.subr.bf16.mxu0 0
        %693 = vmatpush1.bf16.msra.mxu0 %v673
        %694 = vmatprep.subr.bf16.mxu0 0
        %695 = vmatpush1.bf16.msra.mxu0 %v672
        %696 = vmatprep.subr.bf16.mxu0 0
        %697 = vmatpush1.bf16.msra.mxu0 %v671
        %698 = vmatprep.subr.bf16.mxu0 0
        %699 = vmatpush2.bf16.msra.mxu0 0
        %700 = vmatprep.subr.bf16.mxu0 0
        %701 = vmatpush2.bf16.msra.mxu0 0
        %702 = vmatprep.subr.bf16.mxu0 0
        %703 = vmatpush2.bf16.msra.mxu0 0
        %704 = vmatprep.subr.bf16.mxu0 0
        %705 = vmatpush2.bf16.msra.mxu0 0
        %706 = vmatprep.subr.bf16.mxu0 0
        %707 = vmatpush2.bf16.msra.mxu0 0
        %708 = vmatprep.subr.bf16.mxu0 0
        %709 = vmatpush2.bf16.msra.mxu0 0
        %710 = vmatprep.subr.bf16.mxu0 0
        %711 = vmatpush2.bf16.msra.mxu0 0
        %712 = vmatprep.subr.bf16.mxu0 0
        %713 = vmatpush2.bf16.msra.mxu0 0
        %714 = vmatprep.mubr.bf16.mxu0 0
        %715 = vmatmul.mubr.bf16.gmra.mxu0 %v680
        %v716 = vpop.f32.mrf.mxu0
        %v717 = vadd.f32 0.0, %v716
        %v718 = vpop.f32.mrf.mxu0
        %v719 = vpop.f32.mrf.mxu0
        %v720 = vadd.f32 0.0, %v719
        %v721 = vpop.f32.mrf.mxu0
        %722 = vdwg.mxu0
        %v723 = vadd.f32 %v614, %v717
        %v724 = vadd.f32 %v615, %v720
        %v725 = vld [vmem:[%s265 + $0x8] sm:$0x7]
        %s726 = scalar_lea.vmem [#allocation2], 128
        %v727 = vld [vmem:[%s726] sm:$0xf]
        %v728 = vld [vmem:[%s726 + $0x4] sm:$0xf]
        %v729 = vld [vmem:[%s726 + $0x8] sm:$0xf]
        %v730 = vld [vmem:[%s726 + $0xc] sm:$0xf]
        %v731 = vld [vmem:[%s726 + $0x10] sm:$0xf]
        %v732 = vld [vmem:[%s726 + $0x14] sm:$0xf]
        %v733 = vld [vmem:[%s726 + $0x18] sm:$0xf]
        %v734 = vld [vmem:[%s726 + $0x1c] sm:$0xf]
        %v737 = vunpack.c.l.b16 %v616
        %v738 = vunpack.c.l.b16 %v725
        %v739 = vpack.c.b16 %v343, %v737
        %v740 = vpack.c.b16 %v738, %v738
        %vm741 = vsmask.f32 5376
        %v743 = vshrl.u32 %v739, 16
        %v745 = vrot.slane %v743, 2
        %v746 = vshll.u32 %v739, 16
        %v748 = vrot.slane %v746, 3
        %v749 = vor.u32 %v745, %v748
        %v751 = vshrl.u32 %v740, 16
        %v753 = vrot.slane %v751, 2
        %v754 = vshll.u32 %v740, 16
        %v756 = vrot.slane %v754, 3
        %v757 = vor.u32 %v753, %v756
        %v758 = vsel %vm741, %v749, %v757
        %v767 = vunpack.c.l.b16 %v727
        %v768 = vunpack.c.l.b16 %v728
        %v769 = vunpack.c.l.b16 %v729
        %v770 = vunpack.c.l.b16 %v730
        %v771 = vunpack.c.l.b16 %v731
        %v772 = vunpack.c.l.b16 %v732
        %v773 = vunpack.c.l.b16 %v733
        %v774 = vunpack.c.l.b16 %v734
        %v775 = vpack.c.b16 %v768, %v767
        %v776 = vpack.c.b16 %v770, %v769
        %v777 = vpack.c.b16 %v772, %v771
        %v778 = vpack.c.b16 %v774, %v773
        %v784 = vsel %vm384, %v758, 0
        %786 = vmatprep.subr.bf16.mxu0 0
        %787 = vmatpush1.bf16.msra.mxu0 0
        %788 = vmatprep.subr.bf16.mxu0 0
        %789 = vmatpush1.bf16.msra.mxu0 0
        %790 = vmatprep.subr.bf16.mxu0 0
        %791 = vmatpush1.bf16.msra.mxu0 0
        %792 = vmatprep.subr.bf16.mxu0 0
        %793 = vmatpush1.bf16.msra.mxu0 0
        %794 = vmatprep.subr.bf16.mxu0 0
        %795 = vmatpush1.bf16.msra.mxu0 %v778
        %796 = vmatprep.subr.bf16.mxu0 0
        %797 = vmatpush1.bf16.msra.mxu0 %v777
        %798 = vmatprep.subr.bf16.mxu0 0
        %799 = vmatpush1.bf16.msra.mxu0 %v776
        %800 = vmatprep.subr.bf16.mxu0 0
        %801 = vmatpush1.bf16.msra.mxu0 %v775
        %802 = vmatprep.subr.bf16.mxu0 0
        %803 = vmatpush2.bf16.msra.mxu0 0
        %804 = vmatprep.subr.bf16.mxu0 0
        %805 = vmatpush2.bf16.msra.mxu0 0
        %806 = vmatprep.subr.bf16.mxu0 0
        %807 = vmatpush2.bf16.msra.mxu0 0
        %808 = vmatprep.subr.bf16.mxu0 0
        %809 = vmatpush2.bf16.msra.mxu0 0
        %810 = vmatprep.subr.bf16.mxu0 0
        %811 = vmatpush2.bf16.msra.mxu0 0
        %812 = vmatprep.subr.bf16.mxu0 0
        %813 = vmatpush2.bf16.msra.mxu0 0
        %814 = vmatprep.subr.bf16.mxu0 0
        %815 = vmatpush2.bf16.msra.mxu0 0
        %816 = vmatprep.subr.bf16.mxu0 0
        %817 = vmatpush2.bf16.msra.mxu0 0
        %818 = vmatprep.mubr.bf16.mxu0 0
        %819 = vmatmul.mubr.bf16.gmra.mxu0 %v784
        %v820 = vpop.f32.mrf.mxu0
        %v821 = vadd.f32 0.0, %v820
        %v822 = vpop.f32.mrf.mxu0
        %v823 = vpop.f32.mrf.mxu0
        %v824 = vadd.f32 0.0, %v823
        %v825 = vpop.f32.mrf.mxu0
        %826 = vdwg.mxu0
        %v827 = vadd.f32 %v723, %v821
        %v828 = vadd.f32 %v724, %v824
        %v829 = vld [vmem:[%s265] sm:$0x8]
        %vm830 = vcmask 1042432
        %vm831 = vcmask 1046532
        %vm832 = vmor %vm830, %vm831
        %v833 = vrot.slane %v509, 5
        %v834 = vrot.slane %v833, 4
        %v835 = vrot.slane %v510, 5
        %v836 = vsel %vm832, %v834, %v835
        %v837 = vrot.slane %v835, 4
        %vm838 = vcmp.ne.s16.totalorder %v833, 0
        %vm839 = vcmp.ne.s16.totalorder %v836, 0
        %vm840 = vcmp.ne.s16.totalorder %v837, 0
        %v841 = vsel %vm838, %v829, 0
        %v842 = vsel %vm839, %v312, 0
        %v843 = vsel %vm840, %v725, 0
        %s844 = scalar_lea.vmem [#allocation2], 160
        %v845 = vld [vmem:[%s844] sm:$0xf]
        %v846 = vld [vmem:[%s844 + $0x4] sm:$0xf]
        %v847 = vld [vmem:[%s844 + $0x8] sm:$0xf]
        %v848 = vld [vmem:[%s844 + $0xc] sm:$0xf]
        %v849 = vld [vmem:[%s844 + $0x10] sm:$0xf]
        %v850 = vld [vmem:[%s844 + $0x14] sm:$0xf]
        %v851 = vld [vmem:[%s844 + $0x18] sm:$0xf]
        %v852 = vld [vmem:[%s844 + $0x1c] sm:$0xf]
        %v856 = vunpack.c.l.b16 %v841
        %v857 = vunpack.c.l.b16 %v842
        %v858 = vunpack.c.l.b16 %v843
        %v859 = vpack.c.b16 %v857, %v856
        %v860 = vpack.c.b16 %v858, %v858
        %vm861 = vcmask 1044480
        %v862 = vrot.slane %v859, 3
        %v863 = vrot.slane %v860, 3
        %v864 = vsel %vm861, %v862, %v863
        %v873 = vunpack.c.l.b16 %v845
        %v874 = vunpack.c.l.b16 %v846
        %v875 = vunpack.c.l.b16 %v847
        %v876 = vunpack.c.l.b16 %v848
        %v877 = vunpack.c.l.b16 %v849
        %v878 = vunpack.c.l.b16 %v850
        %v879 = vunpack.c.l.b16 %v851
        %v880 = vunpack.c.l.b16 %v852
        %v881 = vpack.c.b16 %v874, %v873
        %v882 = vpack.c.b16 %v876, %v875
        %v883 = vpack.c.b16 %v878, %v877
        %v884 = vpack.c.b16 %v880, %v879
        %v890 = vsel %vm384, %v864, 0
        %892 = vmatprep.subr.bf16.mxu0 0
        %893 = vmatpush1.bf16.msra.mxu0 0
        %894 = vmatprep.subr.bf16.mxu0 0
        %895 = vmatpush1.bf16.msra.mxu0 0
        %896 = vmatprep.subr.bf16.mxu0 0
        %897 = vmatpush1.bf16.msra.mxu0 0
        %898 = vmatprep.subr.bf16.mxu0 0
        %899 = vmatpush1.bf16.msra.mxu0 0
        %900 = vmatprep.subr.bf16.mxu0 0
        %901 = vmatpush1.bf16.msra.mxu0 %v884
        %902 = vmatprep.subr.bf16.mxu0 0
        %903 = vmatpush1.bf16.msra.mxu0 %v883
        %904 = vmatprep.subr.bf16.mxu0 0
        %905 = vmatpush1.bf16.msra.mxu0 %v882
        %906 = vmatprep.subr.bf16.mxu0 0
        %907 = vmatpush1.bf16.msra.mxu0 %v881
        %908 = vmatprep.subr.bf16.mxu0 0
        %909 = vmatpush2.bf16.msra.mxu0 0
        %910 = vmatprep.subr.bf16.mxu0 0
        %911 = vmatpush2.bf16.msra.mxu0 0
        %912 = vmatprep.subr.bf16.mxu0 0
        %913 = vmatpush2.bf16.msra.mxu0 0
        %914 = vmatprep.subr.bf16.mxu0 0
        %915 = vmatpush2.bf16.msra.mxu0 0
        %916 = vmatprep.subr.bf16.mxu0 0
        %917 = vmatpush2.bf16.msra.mxu0 0
        %918 = vmatprep.subr.bf16.mxu0 0
        %919 = vmatpush2.bf16.msra.mxu0 0
        %920 = vmatprep.subr.bf16.mxu0 0
        %921 = vmatpush2.bf16.msra.mxu0 0
        %922 = vmatprep.subr.bf16.mxu0 0
        %923 = vmatpush2.bf16.msra.mxu0 0
        %924 = vmatprep.mubr.bf16.mxu0 0
        %925 = vmatmul.mubr.bf16.gmra.mxu0 %v890
        %v926 = vpop.f32.mrf.mxu0
        %v927 = vadd.f32 0.0, %v926
        %v928 = vpop.f32.mrf.mxu0
        %v929 = vpop.f32.mrf.mxu0
        %v930 = vadd.f32 0.0, %v929
        %v931 = vpop.f32.mrf.mxu0
        %932 = vdwg.mxu0
        %v933 = vadd.f32 %v827, %v927
        %v934 = vadd.f32 %v828, %v930
        %v935 = vld [vmem:[%s265 + $0x8] sm:$0xf]
        %v936 = vsel %vm317, %v312, 0
        %v937 = vsel %vm318, %v935, 0
        %s938 = scalar_lea.vmem [#allocation2], 192
        %v939 = vld [vmem:[%s938] sm:$0xf]
        %v940 = vld [vmem:[%s938 + $0x4] sm:$0xf]
        %v941 = vld [vmem:[%s938 + $0x8] sm:$0xf]
        %v942 = vld [vmem:[%s938 + $0xc] sm:$0xf]
        %v943 = vld [vmem:[%s938 + $0x10] sm:$0xf]
        %v944 = vld [vmem:[%s938 + $0x14] sm:$0xf]
        %v945 = vld [vmem:[%s938 + $0x18] sm:$0xf]
        %v946 = vld [vmem:[%s938 + $0x1c] sm:$0xf]
        %v949 = vunpack.c.l.b16 %v936
        %v950 = vunpack.c.l.b16 %v937
        %v951 = vpack.c.b16 %v950, %v949
        %v960 = vunpack.c.l.b16 %v939
        %v961 = vunpack.c.l.b16 %v940
        %v962 = vunpack.c.l.b16 %v941
        %v963 = vunpack.c.l.b16 %v942
        %v964 = vunpack.c.l.b16 %v943
        %v965 = vunpack.c.l.b16 %v944
        %v966 = vunpack.c.l.b16 %v945
        %v967 = vunpack.c.l.b16 %v946
        %v968 = vpack.c.b16 %v961, %v960
        %v969 = vpack.c.b16 %v963, %v962
        %v970 = vpack.c.b16 %v965, %v964
        %v971 = vpack.c.b16 %v967, %v966
        %v977 = vsel %vm384, %v951, 0
        %979 = vmatprep.subr.bf16.mxu0 0
        %980 = vmatpush1.bf16.msra.mxu0 0
        %981 = vmatprep.subr.bf16.mxu0 0
        %982 = vmatpush1.bf16.msra.mxu0 0
        %983 = vmatprep.subr.bf16.mxu0 0
        %984 = vmatpush1.bf16.msra.mxu0 0
        %985 = vmatprep.subr.bf16.mxu0 0
        %986 = vmatpush1.bf16.msra.mxu0 0
        %987 = vmatprep.subr.bf16.mxu0 0
        %988 = vmatpush1.bf16.msra.mxu0 %v971
        %989 = vmatprep.subr.bf16.mxu0 0
        %990 = vmatpush1.bf16.msra.mxu0 %v970
        %991 = vmatprep.subr.bf16.mxu0 0
        %992 = vmatpush1.bf16.msra.mxu0 %v969
        %993 = vmatprep.subr.bf16.mxu0 0
        %994 = vmatpush1.bf16.msra.mxu0 %v968
        %995 = vmatprep.subr.bf16.mxu0 0
        %996 = vmatpush2.bf16.msra.mxu0 0
        %997 = vmatprep.subr.bf16.mxu0 0
        %998 = vmatpush2.bf16.msra.mxu0 0
        %999 = vmatprep.subr.bf16.mxu0 0
        %1000 = vmatpush2.bf16.msra.mxu0 0
        %1001 = vmatprep.subr.bf16.mxu0 0
        %1002 = vmatpush2.bf16.msra.mxu0 0
        %1003 = vmatprep.subr.bf16.mxu0 0
        %1004 = vmatpush2.bf16.msra.mxu0 0
        %1005 = vmatprep.subr.bf16.mxu0 0
        %1006 = vmatpush2.bf16.msra.mxu0 0
        %1007 = vmatprep.subr.bf16.mxu0 0
        %1008 = vmatpush2.bf16.msra.mxu0 0
        %1009 = vmatprep.subr.bf16.mxu0 0
        %1010 = vmatpush2.bf16.msra.mxu0 0
        %1011 = vmatprep.mubr.bf16.mxu0 0
        %1012 = vmatmul.mubr.bf16.gmra.mxu0 %v977
        %v1013 = vpop.f32.mrf.mxu0
        %v1014 = vadd.f32 0.0, %v1013
        %v1015 = vpop.f32.mrf.mxu0
        %v1016 = vpop.f32.mrf.mxu0
        %v1017 = vadd.f32 0.0, %v1016
        %v1018 = vpop.f32.mrf.mxu0
        %1019 = vdwg.mxu0
        %v1020 = vadd.f32 %v933, %v1014
        %v1021 = vadd.f32 %v934, %v1017
        %v1022 = vld [vmem:[%s265 + $0x4] sm:$0xf]
        %v1023 = vld [vmem:[%s265 + $0x8] sm:$0xf]
        %v1024 = vld [vmem:[%s265 + $0xc] sm:$0x1]
        %s1025 = scalar_lea.vmem [#allocation2], 224
        %v1026 = vld [vmem:[%s1025] sm:$0xf]
        %v1027 = vld [vmem:[%s1025 + $0x4] sm:$0xf]
        %v1028 = vld [vmem:[%s1025 + $0x8] sm:$0xf]
        %v1029 = vld [vmem:[%s1025 + $0xc] sm:$0xf]
        %v1030 = vld [vmem:[%s1025 + $0x10] sm:$0xf]
        %v1031 = vld [vmem:[%s1025 + $0x14] sm:$0xf]
        %v1032 = vld [vmem:[%s1025 + $0x18] sm:$0xf]
        %v1033 = vld [vmem:[%s1025 + $0x1c] sm:$0xf]
        %v1037 = vunpack.c.l.b16 %v1022
        %v1038 = vunpack.c.l.b16 %v1023
        %v1039 = vunpack.c.l.b16 %v1024
        %v1040 = vpack.c.b16 %v1038, %v1037
        %v1041 = vpack.c.b16 %v1039, %v1039
        %v1043 = vshrl.u32 %v1040, 16
        %v1045 = vshll.u32 %v1040, 16
        %v1047 = vrot.slane %v1045, 1
        %v1048 = vor.u32 %v1043, %v1047
        %v1050 = vshll.u32 %v1041, 16
        %v1052 = vrot.slane %v1050, 1
        %v1053 = vsel %vm347, %v1048, %v1052
        %v1062 = vunpack.c.l.b16 %v1026
        %v1063 = vunpack.c.l.b16 %v1027
        %v1064 = vunpack.c.l.b16 %v1028
        %v1065 = vunpack.c.l.b16 %v1029
        %v1066 = vunpack.c.l.b16 %v1030
        %v1067 = vunpack.c.l.b16 %v1031
        %v1068 = vunpack.c.l.b16 %v1032
        %v1069 = vunpack.c.l.b16 %v1033
        %v1070 = vpack.c.b16 %v1063, %v1062
        %v1071 = vpack.c.b16 %v1065, %v1064
        %v1072 = vpack.c.b16 %v1067, %v1066
        %v1073 = vpack.c.b16 %v1069, %v1068
        %v1079 = vsel %vm384, %v1053, 0
        %1081 = vmatprep.subr.bf16.mxu0 0
        %1082 = vmatpush1.bf16.msra.mxu0 0
        %1083 = vmatprep.subr.bf16.mxu0 0
        %1084 = vmatpush1.bf16.msra.mxu0 0
        %1085 = vmatprep.subr.bf16.mxu0 0
        %1086 = vmatpush1.bf16.msra.mxu0 0
        %1087 = vmatprep.subr.bf16.mxu0 0
        %1088 = vmatpush1.bf16.msra.mxu0 0
        %1089 = vmatprep.subr.bf16.mxu0 0
        %1090 = vmatpush1.bf16.msra.mxu0 %v1073
        %1091 = vmatprep.subr.bf16.mxu0 0
        %1092 = vmatpush1.bf16.msra.mxu0 %v1072
        %1093 = vmatprep.subr.bf16.mxu0 0
        %1094 = vmatpush1.bf16.msra.mxu0 %v1071
        %1095 = vmatprep.subr.bf16.mxu0 0
        %1096 = vmatpush1.bf16.msra.mxu0 %v1070
        %1097 = vmatprep.subr.bf16.mxu0 0
        %1098 = vmatpush2.bf16.msra.mxu0 0
        %1099 = vmatprep.subr.bf16.mxu0 0
        %1100 = vmatpush2.bf16.msra.mxu0 0
        %1101 = vmatprep.subr.bf16.mxu0 0
        %1102 = vmatpush2.bf16.msra.mxu0 0
        %1103 = vmatprep.subr.bf16.mxu0 0
        %1104 = vmatpush2.bf16.msra.mxu0 0
        %1105 = vmatprep.subr.bf16.mxu0 0
        %1106 = vmatpush2.bf16.msra.mxu0 0
        %1107 = vmatprep.subr.bf16.mxu0 0
        %1108 = vmatpush2.bf16.msra.mxu0 0
        %1109 = vmatprep.subr.bf16.mxu0 0
        %1110 = vmatpush2.bf16.msra.mxu0 0
        %1111 = vmatprep.subr.bf16.mxu0 0
        %1112 = vmatpush2.bf16.msra.mxu0 0
        %1113 = vmatprep.mubr.bf16.mxu0 0
        %1114 = vmatmul.mubr.bf16.gmra.mxu0 %v1079
        %v1115 = vpop.f32.mrf.mxu0
        %v1116 = vadd.f32 0.0, %v1115
        %v1117 = vpop.f32.mrf.mxu0
        %v1118 = vpop.f32.mrf.mxu0
        %v1119 = vadd.f32 0.0, %v1118
        %v1120 = vpop.f32.mrf.mxu0
        %1121 = vdwg.mxu0
        %v1122 = vadd.f32 %v1020, %v1116
        %v1123 = vadd.f32 %v1021, %v1119
        %v1124 = vld [vmem:[%s265 + $0x4] sm:$0xe]
        %v1125 = vsel %vm519, %v1124, 0
        %v1126 = vsel %vm520, %v1023, 0
        %v1127 = vsel %vm521, %v1024, 0
        %s1128 = scalar_lea.vmem [#allocation2], 256
        %v1129 = vld [vmem:[%s1128] sm:$0xf]
        %v1130 = vld [vmem:[%s1128 + $0x4] sm:$0xf]
        %v1131 = vld [vmem:[%s1128 + $0x8] sm:$0xf]
        %v1132 = vld [vmem:[%s1128 + $0xc] sm:$0xf]
        %v1133 = vld [vmem:[%s1128 + $0x10] sm:$0xf]
        %v1134 = vld [vmem:[%s1128 + $0x14] sm:$0xf]
        %v1135 = vld [vmem:[%s1128 + $0x18] sm:$0xf]
        %v1136 = vld [vmem:[%s1128 + $0x1c] sm:$0xf]
        %v1140 = vunpack.c.l.b16 %v1125
        %v1141 = vunpack.c.l.b16 %v1126
        %v1142 = vunpack.c.l.b16 %v1127
        %v1143 = vpack.c.b16 %v1141, %v1140
        %v1144 = vpack.c.b16 %v1142, %v1142
        %v1145 = vrot.slane %v1143, 1
        %v1146 = vrot.slane %v1144, 1
        %v1147 = vsel %vm542, %v1145, %v1146
        %v1156 = vunpack.c.l.b16 %v1129
        %v1157 = vunpack.c.l.b16 %v1130
        %v1158 = vunpack.c.l.b16 %v1131
        %v1159 = vunpack.c.l.b16 %v1132
        %v1160 = vunpack.c.l.b16 %v1133
        %v1161 = vunpack.c.l.b16 %v1134
        %v1162 = vunpack.c.l.b16 %v1135
        %v1163 = vunpack.c.l.b16 %v1136
        %v1164 = vpack.c.b16 %v1157, %v1156
        %v1165 = vpack.c.b16 %v1159, %v1158
        %v1166 = vpack.c.b16 %v1161, %v1160
        %v1167 = vpack.c.b16 %v1163, %v1162
        %v1173 = vsel %vm384, %v1147, 0
        %1175 = vmatprep.subr.bf16.mxu0 0
        %1176 = vmatpush1.bf16.msra.mxu0 0
        %1177 = vmatprep.subr.bf16.mxu0 0
        %1178 = vmatpush1.bf16.msra.mxu0 0
        %1179 = vmatprep.subr.bf16.mxu0 0
        %1180 = vmatpush1.bf16.msra.mxu0 0
        %1181 = vmatprep.subr.bf16.mxu0 0
        %1182 = vmatpush1.bf16.msra.mxu0 0
        %1183 = vmatprep.subr.bf16.mxu0 0
        %1184 = vmatpush1.bf16.msra.mxu0 %v1167
        %1185 = vmatprep.subr.bf16.mxu0 0
        %1186 = vmatpush1.bf16.msra.mxu0 %v1166
        %1187 = vmatprep.subr.bf16.mxu0 0
        %1188 = vmatpush1.bf16.msra.mxu0 %v1165
        %1189 = vmatprep.subr.bf16.mxu0 0
        %1190 = vmatpush1.bf16.msra.mxu0 %v1164
        %1191 = vmatprep.subr.bf16.mxu0 0
        %1192 = vmatpush2.bf16.msra.mxu0 0
        %1193 = vmatprep.subr.bf16.mxu0 0
        %1194 = vmatpush2.bf16.msra.mxu0 0
        %1195 = vmatprep.subr.bf16.mxu0 0
        %1196 = vmatpush2.bf16.msra.mxu0 0
        %1197 = vmatprep.subr.bf16.mxu0 0
        %1198 = vmatpush2.bf16.msra.mxu0 0
        %1199 = vmatprep.subr.bf16.mxu0 0
        %1200 = vmatpush2.bf16.msra.mxu0 0
        %1201 = vmatprep.subr.bf16.mxu0 0
        %1202 = vmatpush2.bf16.msra.mxu0 0
        %1203 = vmatprep.subr.bf16.mxu0 0
        %1204 = vmatpush2.bf16.msra.mxu0 0
        %1205 = vmatprep.subr.bf16.mxu0 0
        %1206 = vmatpush2.bf16.msra.mxu0 0
        %1207 = vmatprep.mubr.bf16.mxu0 0
        %1208 = vmatmul.mubr.bf16.gmra.mxu0 %v1173
        %v1209 = vpop.f32.mrf.mxu0
        %v1210 = vadd.f32 0.0, %v1209
        %v1211 = vpop.f32.mrf.mxu0
        %v1212 = vpop.f32.mrf.mxu0
        %v1213 = vadd.f32 0.0, %v1212
        %v1214 = vpop.f32.mrf.mxu0
        %1215 = vdwg.mxu0
        %v1216 = vadd.f32 %v1122, %v1210
        %v1217 = vadd.f32 %v1123, %v1213
        %v1218 = vld [vmem:[%s268] sm:$0x1]
        %v1220 = vlaneseq
        %v1221 = vshrl.u32 %v1220, 7
        %v1222 = vsub.s32 0, %v1221
        %v1223 = vrot.slane %v1218, %v1222
        %v1225 = vadd.f32 %v1216, %v1223
        %v1226 = vadd.f32 %v1217, %v1223
        %v1227 = vld [vmem:[%s276] sm:$0xf]
        %v1228 = vld [vmem:[%s276 + $0x4] sm:$0xf]
        %v1229 = vunpack.c.l.bf16 %v1227
        %v1230 = vunpack.c.l.bf16 %v1228
        %v1231 = vadd.f32 %v1225, %v1229
        %v1232 = vadd.f32 %v1226, %v1230
        %v1233 = vmax.f32 %v1231, 0.0
        %v1234 = vmax.f32 %v1232, 0.0
        %v1235 = vpack.c.bf16 %v1234, %v1233
        %v1237 = vunpack.c.l.b16 %v1235
        %v1238 = vunpack.c.h.b16 %v1235
        %v1239 = vpack.c.b16 %v1237, %v1237
        %v1240 = vpack.c.b16 %v1238, %v1238
        %1243 = vst [vmem:[%s260] sm:$0xf] %v1239
        %1244 = vst [vmem:[%s260 + $0x4] sm:$0xf] %v1240
        %s1245 = sand.u32 %s147, 1
        %s1246 = scalar_lea.sflag [#allocation4], %s1245
        %s1247 = sand.u32 %s147, 1
        %s1248 = smul.addr %s1247, 8
        %s1249 = scalar_lea.vmem [#allocation5], %s1248
        // Predicated region
        $region41: #{tpu_custom_call.1} parent=35 // pred_check
          %p1250 = pneg %p157
        $region42: #{tpu_custom_call.1} parent=35 // pred_check_branch
          %1252 = sbr.rel (%p1250) target = $region44
        $region43: #{tpu_custom_call.1} parent=35 // pred_region
          %s1254 = ssub.s32 128, 128
          %1255 = vsyncadd %s1246, %s1254
          %s1256 = smul.addr %s23, 2
          %s1257 = sadd.s32 %s24, %s1256
          %s1258 = smul.addr %s1257, 64
          %s1259 = scalar_lea.hbm %s4, %s1258
          %s1260 = sshll.u32 %s1249, 4
          %s1261 = int_to_ptr.vmem [resolvable:$true] %s1260
          %1266 = dma.vmem_to_hbm [thread:$0]  %s1261, 128, %s1259, %s1246, 64, 64, 4
        $region44: #{tpu_custom_call.1} parent=35 // pred_fallthru
          _
      $region36: #{tpu_custom_call.1} parent=5 // pred_fallthru
        _
      %p1267 = scmp.le.s32.totalorder 2, %s14
      // Predicated region
      $region45: #{tpu_custom_call.1} parent=5 // pred_check
        %p1268 = pneg %p1267
      $region46: #{tpu_custom_call.1} parent=5 // pred_check_branch
        %1270 = sbr.rel (%p1268) target = $region48
      $region47: #{tpu_custom_call.1} parent=5 // pred_region
        %s1271 = ssub.s32 %s14, 2
        // Predicated region
        $region49: #{tpu_custom_call.1} parent=47 // pred_check
          %p1272 = pneg %p163
        $region50: #{tpu_custom_call.1} parent=47 // pred_check_branch
          %1274 = sbr.rel (%p1272) target = $region52
        $region51: #{tpu_custom_call.1} parent=47 // pred_region
          %s1275 = sand.u32 %s148, 1
          %s1276 = scalar_lea.sflag [#allocation4], %s1275
          %s1277 = sand.u32 %s148, 1
          %s1278 = smul.addr %s1277, 8
          %s1279 = scalar_lea.vmem [#allocation5], %s1278
          %1280 = dma.done %s1276, 128
        $region52: #{tpu_custom_call.1} parent=47 // pred_fallthru
          _
      $region48: #{tpu_custom_call.1} parent=5 // pred_fallthru
        _
    $region6: #{tpu_custom_call.1} parent=1 // loop_footer
      %s18 = sadd.s32 1, %s14
    $region7: #{tpu_custom_call.1} parent=1 // loop_footer_branch
      %13 = sbr.rel target = $region3
    $region8: #{tpu_custom_call.1} parent=1 // loop_exit
      _
    %1281 = vsyncpa [#allocation3], 1
    %s1282 = scalar_lea.sflag [#allocation3], 1
    %1283 = vsyncpa %s1282, 1
    %1284 = vsyncpa [#allocation4], 1
    %s1285 = scalar_lea.sflag [#allocation4], 1
    %1286 = vsyncpa %s1285, 1

</llo_original>
